<compile_context>
chip_gen: v7x
topology: tpu7x:2x2x1
jax: 0.10.0
libtpu: 0.0.40
codegen_flags: <defaults>
</compile_context>

<pallas_src>
import jax
import jax.numpy as jnp
from jax.experimental import pallas as pl
from jax.experimental.pallas import tpu as pltpu


# ---------------------------------------------------------------------------
# Fused kernel: input projection + LSTM recurrence + Linear + log_softmax
# ---------------------------------------------------------------------------
def lstm_fused_kernel(x_ref, w_ih_ref, b_lstm_ref, w_hh_ref, w_fc_ref, b_fc_ref,
                      out_ref, h_sc, c_sc, hflat_sc):
    # x_ref     : (Tb, Bt, E)   bf16  time-major embedded inputs for this block
    # w_ih_ref  : (E, 4H)       bf16  VMEM-resident input-projection weights
    # b_lstm_ref: (1, 4H)       f32   b_ih + b_hh
    # w_hh_ref  : (H, 4H)       bf16
    # w_fc_ref  : (H, O)        bf16
    # b_fc_ref  : (1, O)        f32
    # out_ref   : (Tb, Bt*O)    f32   lane-dense log-probs (time-major rows)
    # h_sc/c_sc : (Bt, H)       f32   recurrent state, persists across time blocks
    # hflat_sc  : (Tb*Bt, H)    f32   block hidden states, time-major flat
    t_blk_idx = pl.program_id(1)

    @pl.when(t_blk_idx == 0)
    def _():
        h_sc[...] = jnp.zeros_like(h_sc)
        c_sc[...] = jnp.zeros_like(c_sc)

    Tb, Bt, E = x_ref.shape
    H = h_sc.shape[1]
    n_out = b_fc_ref.shape[1]

    # ---- Fused (hoisted) input projection: one MXU matmul for the whole block.
    # (Bt is a multiple of 8, so collapsing the leading dims is tile-aligned.)
    x = x_ref[...].reshape(Tb * Bt, E)                               # bf16
    pre = jnp.dot(x, w_ih_ref[...],
                  preferred_element_type=jnp.float32) + b_lstm_ref[...]  # f32

    whh = w_hh_ref[...]                                              # (H, 4H) bf16

    # Lane mask selecting the g-gate section (lanes 2H..3H) of a 4H gate row:
    # full-width sigmoid/tanh on the EUP + one select, instead of four
    # sub-lane-tile slices in front of the transcendentals.
    lane = jax.lax.broadcasted_iota(jnp.int32, (Bt, 4 * H), 1)
    g_mask = (lane >= 2 * H) & (lane < 3 * H)

    # ---- Recurrence, unrolled over the time block (PyTorch gate order i,f,g,o).
    # Only one (Bt, H) x (H, 4H) bf16 MXU matmul per serial step; all gate math
    # stays f32 on the VPU/EUP (v5e-safe). Tb is capped at 32, so full unroll
    # keeps code size bounded while giving the LLO scheduler full visibility.
    for s in range(Tb):
        gates = pre[s * Bt:(s + 1) * Bt, :] + jnp.dot(
            h_sc[...].astype(jnp.bfloat16), whh,
            preferred_element_type=jnp.float32)                      # (Bt, 4H) f32
        act = jnp.where(g_mask, jnp.tanh(gates), jax.nn.sigmoid(gates))
        i = act[:, 0 * H:1 * H]
        f = act[:, 1 * H:2 * H]
        g = act[:, 2 * H:3 * H]
        o = act[:, 3 * H:4 * H]
        c_new = f * c_sc[...] + i * g
        h_new = o * jnp.tanh(c_new)
        c_sc[...] = c_new
        h_sc[...] = h_new
        hflat_sc[s * Bt:(s + 1) * Bt, :] = h_new      # dense, sublane-aligned store

    # ---- Fused Linear + log_softmax over the whole block: ONE MXU matmul and a
    # vectorized row-wise softmax; the (B, T, H) activations never touch HBM.
    hall = hflat_sc[...].astype(jnp.bfloat16)                        # (Tb*Bt, H)
    logits = jnp.dot(hall, w_fc_ref[...],
                     preferred_element_type=jnp.float32) + b_fc_ref[...]
    m = jnp.max(logits, axis=-1, keepdims=True)
    shifted = logits - m
    lse = jnp.log(jnp.sum(jnp.exp(shifted), axis=-1, keepdims=True))
    logp = shifted - lse                                             # (Tb*Bt, O)

    # Write lane-dense output: out row s = [seq0 logprobs | seq1 logprobs | ...].
    # Leading-dim split below is layout-free (Bt % 8 == 0); the per-sequence
    # lane-offset stores hit the VMEM output block only -- the HBM DMA of the
    # (Tb, Bt*O) block is dense rows (the part that matters for bandwidth).
    logp3 = logp.reshape(Tb, Bt, n_out)
    for b in range(Bt):
        out_ref[:, b * n_out:(b + 1) * n_out] = logp3[:, b, :]


def _pick_time_block(T):
    if T <= 32:
        return T                            # single block == full time dim
    for cand in (32, 24, 16, 8):            # multiples of 8 (sublane tile)
        if T % cand == 0:
            return cand
    return T                                # fallback: one big block


def _pick_batch_tile(B_pad, n_out):
    # Split the (megacore-parallel) batch axis only when it is large enough to
    # matter; the lane-dense output block width b_tile*n_out must stay a
    # multiple of 128 unless the tile covers the whole padded batch.
    if B_pad > 256:
        for cand in (256, 128, 64, 32, 16, 8):
            if B_pad % cand == 0 and (cand * n_out) % 128 == 0:
                return cand
    return B_pad


def run_lstm_fused(emb_tm, w_ih_t, lstm_bias, w_hh_t, w_fc_t, b_fc):
    """emb_tm: (T, B_pad, E) bf16 time-major embeddings (B_pad % 8 == 0).
    Returns (T, B_pad * O) f32 log-probs (time-major, lane-dense)."""
    T, B_pad, E = emb_tm.shape
    G = w_ih_t.shape[1]
    H = w_hh_t.shape[0]
    n_out = w_fc_t.shape[1]

    t_blk = _pick_time_block(T)
    b_tile = _pick_batch_tile(B_pad, n_out)
    assert B_pad % 8 == 0 and B_pad % b_tile == 0 and T % t_blk == 0
    assert b_tile == B_pad or (b_tile * n_out) % 128 == 0

    grid = (B_pad // b_tile, T // t_blk)    # batch tiles outer, time blocks inner
    return pl.pallas_call(
        lstm_fused_kernel,
        out_shape=jax.ShapeDtypeStruct((T, B_pad * n_out), jnp.float32),
        grid_spec=pltpu.PrefetchScalarGridSpec(
            num_scalar_prefetch=0,
            grid=grid,
            in_specs=[
                pl.BlockSpec((t_blk, b_tile, E), lambda b, t: (t, b, 0)),
                pl.BlockSpec((E, G), lambda b, t: (0, 0)),
                pl.BlockSpec((1, G), lambda b, t: (0, 0)),
                pl.BlockSpec((H, G), lambda b, t: (0, 0)),
                pl.BlockSpec((H, n_out), lambda b, t: (0, 0)),
                pl.BlockSpec((1, n_out), lambda b, t: (0, 0)),
            ],
            out_specs=pl.BlockSpec((t_blk, b_tile * n_out), lambda b, t: (t, b)),
            scratch_shapes=[
                pltpu.VMEM((b_tile, H), jnp.float32),           # h state (carry)
                pltpu.VMEM((b_tile, H), jnp.float32),           # c state (carry)
                pltpu.VMEM((t_blk * b_tile, H), jnp.float32),   # block hidden states
            ],
        ),
        compiler_params=pltpu.CompilerParams(
            # batch tiles may shard across v7x TensorCores; time must stay
            # sequential (innermost) because h/c carry across time blocks.
            dimension_semantics=("parallel", "arbitrary"),
            # Sized for v7x's 64 MiB physical VMEM; at these demo shapes the
            # working set is tiny. Re-budget t_blk/b_tile at real model sizes.
            vmem_limit_bytes=48 * 1024 * 1024),
    )(emb_tm, w_ih_t, lstm_bias, w_hh_t, w_fc_t, b_fc)


# ---------------------------------------------------------------------------
# Full model forward
# ---------------------------------------------------------------------------
def lstm_model_forward(tokens, params):
    B, T = tokens.shape
    n_out = params["b_fc"].shape[1]
    # TODO(synk): the embedding gather stays in plain XLA (data-dependent row
    # gather; a DMA-gather kernel is not worth it at these sizes). Gathering
    # with tokens.T produces the time-major layout the kernel wants directly.
    emb_tm = params["embedding"][tokens.T]                      # (T, B, E) bf16
    # Pad batch to a multiple of 8 so per-step stores/matmuls are sublane-aligned.
    B_pad = max(8, -(-B // 8) * 8)
    if B_pad != B:
        emb_tm = jnp.pad(emb_tm, ((0, 0), (0, B_pad - B), (0, 0)))
    logp = run_lstm_fused(emb_tm, params["w_ih_t"], params["lstm_bias"],
                          params["w_hh_t"], params["w_fc_t"], params["b_fc"])
    logp = logp.reshape(T, B_pad, n_out)[:, :B, :]              # drop batch pad
    # Batch-major flatten to match PyTorch's out.contiguous().view(-1, H) for
    # nn.LSTM(batch_first=True): row index = b*T + t.
    return jnp.transpose(logp, (1, 0, 2)).reshape(B * T, n_out)


# ---------------------------------------------------------------------------
# Pure-XLA reference (mirrors the kernel's bf16-operand / f32-accum math)
# ---------------------------------------------------------------------------
def lstm_model_reference(tokens, params):
    H = params["w_hh_t"].shape[0]
    emb = params["embedding"][tokens]                           # (B, T, E) bf16
    B, T, _ = emb.shape
    w_ih, w_hh, bias = params["w_ih_t"], params["w_hh_t"], params["lstm_bias"]

    def step(carry, x_t):
        h, c = carry
        gates = (jnp.dot(x_t, w_ih, preferred_element_type=jnp.float32)
                 + jnp.dot(h.astype(jnp.bfloat16), w_hh,
                           preferred_element_type=jnp.float32) + bias)
        i = jax.nn.sigmoid(gates[:, 0 * H:1 * H])
        f = jax.nn.sigmoid(gates[:, 1 * H:2 * H])
        g = jnp.tanh(gates[:, 2 * H:3 * H])
        o = jax.nn.sigmoid(gates[:, 3 * H:4 * H])
        c = f * c + i * g
        h = o * jnp.tanh(c)
        return (h, c), h

    h0 = jnp.zeros((B, H), jnp.float32)
    _, hs = jax.lax.scan(step, (h0, h0), jnp.swapaxes(emb, 0, 1))   # (T, B, H)
    hs = jnp.swapaxes(hs, 0, 1).reshape(B * T, H)
    logits = jnp.dot(hs.astype(jnp.bfloat16), params["w_fc_t"],
                     preferred_element_type=jnp.float32) + params["b_fc"]
    return jax.nn.log_softmax(logits, axis=-1)


def init_params(key, vocab_size, embed_dim, hidden_dim, tag_size):
    ks = jax.random.split(key, 6)
    stdv = 1.0 / jnp.sqrt(hidden_dim)
    embedding = jax.random.normal(ks[0], (vocab_size, embed_dim), jnp.float32)
    # PyTorch weight_ih: (4H, E), weight_hh: (4H, H); store pre-transposed.
    w_ih = jax.random.uniform(ks[1], (4 * hidden_dim, embed_dim),
                              jnp.float32, -stdv, stdv)
    w_hh = jax.random.uniform(ks[2], (4 * hidden_dim, hidden_dim),
                              jnp.float32, -stdv, stdv)
    b_ih = jax.random.uniform(ks[3], (4 * hidden_dim,), jnp.float32, -stdv, stdv)
    b_hh = jax.random.uniform(ks[4], (4 * hidden_dim,), jnp.float32, -stdv, stdv)
    w_fc = jax.random.uniform(ks[5], (tag_size, hidden_dim),
                              jnp.float32, -stdv, stdv)
    b_fc = jnp.zeros((tag_size,), jnp.float32)
    return {
        # bf16 MXU operands (halves weight/activation DMA and VMEM); all
        # accumulation, gate math and the softmax stay f32.
        "embedding": embedding.astype(jnp.bfloat16),
        "w_ih_t": w_ih.T.astype(jnp.bfloat16),                  # (E, 4H)
        "w_hh_t": w_hh.T.astype(jnp.bfloat16),                  # (H, 4H)
        "lstm_bias": (b_ih + b_hh).reshape(1, 4 * hidden_dim),  # (1, 4H) f32
        "w_fc_t": w_fc.T.astype(jnp.bfloat16),                  # (H, O)
        "b_fc": b_fc.reshape(1, tag_size),                      # (1, O) f32
    }


if __name__ == "__main__":
    vocab_size, embed_dim, hidden_dim, tag_size = 50, 16, 32, 8
    B, T = 2, 8

    key = jax.random.PRNGKey(0)
    k_tok, k_par = jax.random.split(key)
    tokens = jax.random.randint(k_tok, (B, T), 0, vocab_size, dtype=jnp.int32)
    params = init_params(k_par, vocab_size, embed_dim, hidden_dim, tag_size)

    out = jax.jit(lstm_model_forward)(tokens, params)
    out = jax.block_until_ready(out)
    ref = jax.jit(lstm_model_reference)(tokens, params)
    ref = jax.block_until_ready(ref)

    assert out.shape == (B * T, tag_size), out.shape
    # log_softmax rows sum (in prob space) to ~1
    assert jnp.allclose(jnp.sum(jnp.exp(out), axis=1), 1.0, atol=1e-4)
    # kernel matches the pure-XLA reference (bf16 operands / f32 accumulation)
    assert jnp.max(jnp.abs(out - ref)) < 2e-2, float(jnp.max(jnp.abs(out - ref)))
    print("KERNEL_OK")
</pallas_src>

<mosaic_0001>
module attributes {stable_mosaic.version = 11 : i64} {
  func.func @lstm_fused_kernel(%arg0: i32, %arg1: i32, %arg2: memref<8x8x16xbf16, #tpu.memory_space<vmem>>, %arg3: memref<16x128xbf16, #tpu.memory_space<vmem>>, %arg4: memref<1x128xf32, #tpu.memory_space<vmem>>, %arg5: memref<32x128xbf16, #tpu.memory_space<vmem>>, %arg6: memref<32x8xbf16, #tpu.memory_space<vmem>>, %arg7: memref<1x8xf32, #tpu.memory_space<vmem>>, %arg8: memref<8x64xf32, #tpu.memory_space<vmem>>, %arg9: memref<8x32xf32, #tpu.memory_space<vmem>>, %arg10: memref<8x32xf32, #tpu.memory_space<vmem>>, %arg11: memref<64x32xf32, #tpu.memory_space<vmem>>) attributes {dimension_semantics = [#tpu.dimension_semantics<parallel>, #tpu.dimension_semantics<arbitrary>], iteration_bounds = array<i64: 1, 1>, scalar_prefetch = 0 : i64, scratch_operands = 3 : i64, tpu.core_type = #tpu.core_type<tc>, window_params = [{transform_indices = @transform_0, window_bounds = array<i64: 8, 8, 16>}, {pipeline_mode = #tpu.pipeline_mode<synchronous>, transform_indices = @transform_1, window_bounds = array<i64: 16, 128>}, {pipeline_mode = #tpu.pipeline_mode<synchronous>, transform_indices = @transform_2, window_bounds = array<i64: 1, 128>}, {pipeline_mode = #tpu.pipeline_mode<synchronous>, transform_indices = @transform_3, window_bounds = array<i64: 32, 128>}, {pipeline_mode = #tpu.pipeline_mode<synchronous>, transform_indices = @transform_4, window_bounds = array<i64: 32, 8>}, {pipeline_mode = #tpu.pipeline_mode<synchronous>, transform_indices = @transform_5, window_bounds = array<i64: 1, 8>}, {transform_indices = @transform_6, window_bounds = array<i64: 8, 64>}]} {
    %c0_i32 = arith.constant 0 : i32
    %0 = arith.cmpi eq, %arg1, %c0_i32 : i32
    %1 = arith.extui %0 : i1 to i32
    %c0_i32_0 = arith.constant 0 : i32
    %2 = arith.cmpi ne, %1, %c0_i32_0 : i32
    scf.if %2 {
      %cst_123 = arith.constant 0.000000e+00 : f32
      %259 = vector.broadcast %cst_123 : f32 to vector<8x32xf32>
      %c0_124 = arith.constant 0 : index
      %c0_125 = arith.constant 0 : index
      %260 = vector.load %arg9[%c0_124, %c0_125] : memref<8x32xf32, #tpu.memory_space<vmem>>, vector<8x32xf32>
      tpu.vector_store %arg9[%c0_124, %c0_125], %259 {strides = array<i32>} : memref<8x32xf32, #tpu.memory_space<vmem>>, vector<8x32xf32>,
      %cst_126 = arith.constant 0.000000e+00 : f32
      %261 = vector.broadcast %cst_126 : f32 to vector<8x32xf32>
      %c0_127 = arith.constant 0 : index
      %c0_128 = arith.constant 0 : index
      %262 = vector.load %arg10[%c0_127, %c0_128] : memref<8x32xf32, #tpu.memory_space<vmem>>, vector<8x32xf32>
      tpu.vector_store %arg10[%c0_127, %c0_128], %261 {strides = array<i32>} : memref<8x32xf32, #tpu.memory_space<vmem>>, vector<8x32xf32>,
    } else {
    }
    %c0 = arith.constant 0 : index
    %c0_1 = arith.constant 0 : index
    %c0_2 = arith.constant 0 : index
    %3 = vector.load %arg2[%c0, %c0_1, %c0_2] : memref<8x8x16xbf16, #tpu.memory_space<vmem>>, vector<8x8x16xbf16>
    %4 = vector.shape_cast %3 : vector<8x8x16xbf16> to vector<64x16xbf16>
    %c0_3 = arith.constant 0 : index
    %c0_4 = arith.constant 0 : index
    %5 = vector.load %arg3[%c0_3, %c0_4] : memref<16x128xbf16, #tpu.memory_space<vmem>>, vector<16x128xbf16>
    %cst = arith.constant dense<0.000000e+00> : vector<64x128xf32>
    %6 = tpu.matmul %4, %5, %cst {dimension_numbers = #tpu.dot_dimension_numbers<[1], [0], [0], [1], [0, 0, 1, 1], [], []>} : vector<64x16xbf16>, vector<16x128xbf16>, vector<64x128xf32> -> vector<64x128xf32>
    %c0_5 = arith.constant 0 : index
    %c0_6 = arith.constant 0 : index
    %7 = vector.load %arg4[%c0_5, %c0_6] : memref<1x128xf32, #tpu.memory_space<vmem>>, vector<1x128xf32>
    %8 = vector.broadcast %7 : vector<1x128xf32> to vector<64x128xf32>
    %9 = arith.addf %6, %8 : vector<64x128xf32>
    %c0_7 = arith.constant 0 : index
    %c0_8 = arith.constant 0 : index
    %10 = vector.load %arg5[%c0_7, %c0_8] : memref<32x128xbf16, #tpu.memory_space<vmem>>, vector<32x128xbf16>
    %11 = tpu.iota {dimensions = array<i32: 1>} : vector<8x128xi32>
    %c64_i32 = arith.constant 64 : i32
    %12 = vector.broadcast %c64_i32 : i32 to vector<8x128xi32>
    %13 = arith.cmpi sge, %11, %12 : vector<8x128xi32>
    %c96_i32 = arith.constant 96 : i32
    %14 = vector.broadcast %c96_i32 : i32 to vector<8x128xi32>
    %15 = arith.cmpi slt, %11, %14 : vector<8x128xi32>
    %16 = arith.andi %13, %15 : vector<8x128xi1>
    %17 = vector.extract_strided_slice %9 {offsets = [0, 0], sizes = [8, 128], strides = [1, 1]} : vector<64x128xf32> to vector<8x128xf32>
    %c0_9 = arith.constant 0 : index
    %c0_10 = arith.constant 0 : index
    %18 = vector.load %arg9[%c0_9, %c0_10] : memref<8x32xf32, #tpu.memory_space<vmem>>, vector<8x32xf32>
    %19 = arith.truncf %18 : vector<8x32xf32> to vector<8x32xbf16>
    %cst_11 = arith.constant dense<0.000000e+00> : vector<8x128xf32>
    %20 = tpu.matmul %19, %10, %cst_11 {dimension_numbers = #tpu.dot_dimension_numbers<[1], [0], [0], [1], [0, 0, 1, 1], [], []>} : vector<8x32xbf16>, vector<32x128xbf16>, vector<8x128xf32> -> vector<8x128xf32>
    %21 = arith.addf %17, %20 : vector<8x128xf32>
    %22 = math.tanh %21 : vector<8x128xf32>
    %23 = arith.negf %21 : vector<8x128xf32>
    %24 = math.exp %23 : vector<8x128xf32>
    %cst_12 = arith.constant 1.000000e+00 : f32
    %25 = vector.broadcast %cst_12 : f32 to vector<8x128xf32>
    %26 = arith.addf %25, %24 : vector<8x128xf32>
    %27 = arith.divf %25, %26 : vector<8x128xf32>
    %28 = arith.select %16, %22, %27 : vector<8x128xi1>, vector<8x128xf32>
    %29 = vector.extract_strided_slice %28 {offsets = [0, 0], sizes = [8, 32], strides = [1, 1]} : vector<8x128xf32> to vector<8x32xf32>
    %30 = vector.extract_strided_slice %28 {offsets = [0, 32], sizes = [8, 32], strides = [1, 1]} : vector<8x128xf32> to vector<8x32xf32>
    %31 = vector.extract_strided_slice %28 {offsets = [0, 64], sizes = [8, 32], strides = [1, 1]} : vector<8x128xf32> to vector<8x32xf32>
    %32 = vector.extract_strided_slice %28 {offsets = [0, 96], sizes = [8, 32], strides = [1, 1]} : vector<8x128xf32> to vector<8x32xf32>
    %c0_13 = arith.constant 0 : index
    %c0_14 = arith.constant 0 : index
    %33 = vector.load %arg10[%c0_13, %c0_14] : memref<8x32xf32, #tpu.memory_space<vmem>>, vector<8x32xf32>
    %34 = arith.mulf %30, %33 : vector<8x32xf32>
    %35 = arith.mulf %29, %31 : vector<8x32xf32>
    %36 = arith.addf %34, %35 : vector<8x32xf32>
    %37 = math.tanh %36 : vector<8x32xf32>
    %38 = arith.mulf %32, %37 : vector<8x32xf32>
    %c0_15 = arith.constant 0 : index
    %c0_16 = arith.constant 0 : index
    %39 = vector.load %arg10[%c0_15, %c0_16] : memref<8x32xf32, #tpu.memory_space<vmem>>, vector<8x32xf32>
    tpu.vector_store %arg10[%c0_15, %c0_16], %36 {strides = array<i32>} : memref<8x32xf32, #tpu.memory_space<vmem>>, vector<8x32xf32>,
    %c0_17 = arith.constant 0 : index
    %c0_18 = arith.constant 0 : index
    %40 = vector.load %arg9[%c0_17, %c0_18] : memref<8x32xf32, #tpu.memory_space<vmem>>, vector<8x32xf32>
    tpu.vector_store %arg9[%c0_17, %c0_18], %38 {strides = array<i32>} : memref<8x32xf32, #tpu.memory_space<vmem>>, vector<8x32xf32>,
    %c0_19 = arith.constant 0 : index
    %c0_20 = arith.constant 0 : index
    %41 = vector.load %arg11[%c0_19, %c0_20] : memref<64x32xf32, #tpu.memory_space<vmem>>, vector<8x32xf32>
    tpu.vector_store %arg11[%c0_19, %c0_20], %38 {strides = array<i32>} : memref<64x32xf32, #tpu.memory_space<vmem>>, vector<8x32xf32>,
    %42 = vector.extract_strided_slice %9 {offsets = [8, 0], sizes = [8, 128], strides = [1, 1]} : vector<64x128xf32> to vector<8x128xf32>
    %c0_21 = arith.constant 0 : index
    %c0_22 = arith.constant 0 : index
    %43 = vector.load %arg9[%c0_21, %c0_22] : memref<8x32xf32, #tpu.memory_space<vmem>>, vector<8x32xf32>
    %44 = arith.truncf %43 : vector<8x32xf32> to vector<8x32xbf16>
    %cst_23 = arith.constant dense<0.000000e+00> : vector<8x128xf32>
    %45 = tpu.matmul %44, %10, %cst_23 {dimension_numbers = #tpu.dot_dimension_numbers<[1], [0], [0], [1], [0, 0, 1, 1], [], []>} : vector<8x32xbf16>, vector<32x128xbf16>, vector<8x128xf32> -> vector<8x128xf32>
    %46 = arith.addf %42, %45 : vector<8x128xf32>
    %47 = math.tanh %46 : vector<8x128xf32>
    %48 = arith.negf %46 : vector<8x128xf32>
    %49 = math.exp %48 : vector<8x128xf32>
    %cst_24 = arith.constant 1.000000e+00 : f32
    %50 = vector.broadcast %cst_24 : f32 to vector<8x128xf32>
    %51 = arith.addf %50, %49 : vector<8x128xf32>
    %52 = arith.divf %50, %51 : vector<8x128xf32>
    %53 = arith.select %16, %47, %52 : vector<8x128xi1>, vector<8x128xf32>
    %54 = vector.extract_strided_slice %53 {offsets = [0, 0], sizes = [8, 32], strides = [1, 1]} : vector<8x128xf32> to vector<8x32xf32>
    %55 = vector.extract_strided_slice %53 {offsets = [0, 32], sizes = [8, 32], strides = [1, 1]} : vector<8x128xf32> to vector<8x32xf32>
    %56 = vector.extract_strided_slice %53 {offsets = [0, 64], sizes = [8, 32], strides = [1, 1]} : vector<8x128xf32> to vector<8x32xf32>
    %57 = vector.extract_strided_slice %53 {offsets = [0, 96], sizes = [8, 32], strides = [1, 1]} : vector<8x128xf32> to vector<8x32xf32>
    %c0_25 = arith.constant 0 : index
    %c0_26 = arith.constant 0 : index
    %58 = vector.load %arg10[%c0_25, %c0_26] : memref<8x32xf32, #tpu.memory_space<vmem>>, vector<8x32xf32>
    %59 = arith.mulf %55, %58 : vector<8x32xf32>
    %60 = arith.mulf %54, %56 : vector<8x32xf32>
    %61 = arith.addf %59, %60 : vector<8x32xf32>
    %62 = math.tanh %61 : vector<8x32xf32>
    %63 = arith.mulf %57, %62 : vector<8x32xf32>
    %c0_27 = arith.constant 0 : index
    %c0_28 = arith.constant 0 : index
    %64 = vector.load %arg10[%c0_27, %c0_28] : memref<8x32xf32, #tpu.memory_space<vmem>>, vector<8x32xf32>
    tpu.vector_store %arg10[%c0_27, %c0_28], %61 {strides = array<i32>} : memref<8x32xf32, #tpu.memory_space<vmem>>, vector<8x32xf32>,
    %c0_29 = arith.constant 0 : index
    %c0_30 = arith.constant 0 : index
    %65 = vector.load %arg9[%c0_29, %c0_30] : memref<8x32xf32, #tpu.memory_space<vmem>>, vector<8x32xf32>
    tpu.vector_store %arg9[%c0_29, %c0_30], %63 {strides = array<i32>} : memref<8x32xf32, #tpu.memory_space<vmem>>, vector<8x32xf32>,
    %c8 = arith.constant 8 : index
    %c0_31 = arith.constant 0 : index
    %66 = vector.load %arg11[%c8, %c0_31] : memref<64x32xf32, #tpu.memory_space<vmem>>, vector<8x32xf32>
    tpu.vector_store %arg11[%c8, %c0_31], %63 {strides = array<i32>} : memref<64x32xf32, #tpu.memory_space<vmem>>, vector<8x32xf32>,
    %67 = vector.extract_strided_slice %9 {offsets = [16, 0], sizes = [8, 128], strides = [1, 1]} : vector<64x128xf32> to vector<8x128xf32>
    %c0_32 = arith.constant 0 : index
    %c0_33 = arith.constant 0 : index
    %68 = vector.load %arg9[%c0_32, %c0_33] : memref<8x32xf32, #tpu.memory_space<vmem>>, vector<8x32xf32>
    %69 = arith.truncf %68 : vector<8x32xf32> to vector<8x32xbf16>
    %cst_34 = arith.constant dense<0.000000e+00> : vector<8x128xf32>
    %70 = tpu.matmul %69, %10, %cst_34 {dimension_numbers = #tpu.dot_dimension_numbers<[1], [0], [0], [1], [0, 0, 1, 1], [], []>} : vector<8x32xbf16>, vector<32x128xbf16>, vector<8x128xf32> -> vector<8x128xf32>
    %71 = arith.addf %67, %70 : vector<8x128xf32>
    %72 = math.tanh %71 : vector<8x128xf32>
    %73 = arith.negf %71 : vector<8x128xf32>
    %74 = math.exp %73 : vector<8x128xf32>
    %cst_35 = arith.constant 1.000000e+00 : f32
    %75 = vector.broadcast %cst_35 : f32 to vector<8x128xf32>
    %76 = arith.addf %75, %74 : vector<8x128xf32>
    %77 = arith.divf %75, %76 : vector<8x128xf32>
    %78 = arith.select %16, %72, %77 : vector<8x128xi1>, vector<8x128xf32>
    %79 = vector.extract_strided_slice %78 {offsets = [0, 0], sizes = [8, 32], strides = [1, 1]} : vector<8x128xf32> to vector<8x32xf32>
    %80 = vector.extract_strided_slice %78 {offsets = [0, 32], sizes = [8, 32], strides = [1, 1]} : vector<8x128xf32> to vector<8x32xf32>
    %81 = vector.extract_strided_slice %78 {offsets = [0, 64], sizes = [8, 32], strides = [1, 1]} : vector<8x128xf32> to vector<8x32xf32>
    %82 = vector.extract_strided_slice %78 {offsets = [0, 96], sizes = [8, 32], strides = [1, 1]} : vector<8x128xf32> to vector<8x32xf32>
    %c0_36 = arith.constant 0 : index
    %c0_37 = arith.constant 0 : index
    %83 = vector.load %arg10[%c0_36, %c0_37] : memref<8x32xf32, #tpu.memory_space<vmem>>, vector<8x32xf32>
    %84 = arith.mulf %80, %83 : vector<8x32xf32>
    %85 = arith.mulf %79, %81 : vector<8x32xf32>
    %86 = arith.addf %84, %85 : vector<8x32xf32>
    %87 = math.tanh %86 : vector<8x32xf32>
    %88 = arith.mulf %82, %87 : vector<8x32xf32>
    %c0_38 = arith.constant 0 : index
    %c0_39 = arith.constant 0 : index
    %89 = vector.load %arg10[%c0_38, %c0_39] : memref<8x32xf32, #tpu.memory_space<vmem>>, vector<8x32xf32>
    tpu.vector_store %arg10[%c0_38, %c0_39], %86 {strides = array<i32>} : memref<8x32xf32, #tpu.memory_space<vmem>>, vector<8x32xf32>,
    %c0_40 = arith.constant 0 : index
    %c0_41 = arith.constant 0 : index
    %90 = vector.load %arg9[%c0_40, %c0_41] : memref<8x32xf32, #tpu.memory_space<vmem>>, vector<8x32xf32>
    tpu.vector_store %arg9[%c0_40, %c0_41], %88 {strides = array<i32>} : memref<8x32xf32, #tpu.memory_space<vmem>>, vector<8x32xf32>,
    %c16 = arith.constant 16 : index
    %c0_42 = arith.constant 0 : index
    %91 = vector.load %arg11[%c16, %c0_42] : memref<64x32xf32, #tpu.memory_space<vmem>>, vector<8x32xf32>
    tpu.vector_store %arg11[%c16, %c0_42], %88 {strides = array<i32>} : memref<64x32xf32, #tpu.memory_space<vmem>>, vector<8x32xf32>,
    %92 = vector.extract_strided_slice %9 {offsets = [24, 0], sizes = [8, 128], strides = [1, 1]} : vector<64x128xf32> to vector<8x128xf32>
    %c0_43 = arith.constant 0 : index
    %c0_44 = arith.constant 0 : index
    %93 = vector.load %arg9[%c0_43, %c0_44] : memref<8x32xf32, #tpu.memory_space<vmem>>, vector<8x32xf32>
    %94 = arith.truncf %93 : vector<8x32xf32> to vector<8x32xbf16>
    %cst_45 = arith.constant dense<0.000000e+00> : vector<8x128xf32>
    %95 = tpu.matmul %94, %10, %cst_45 {dimension_numbers = #tpu.dot_dimension_numbers<[1], [0], [0], [1], [0, 0, 1, 1], [], []>} : vector<8x32xbf16>, vector<32x128xbf16>, vector<8x128xf32> -> vector<8x128xf32>
    %96 = arith.addf %92, %95 : vector<8x128xf32>
    %97 = math.tanh %96 : vector<8x128xf32>
    %98 = arith.negf %96 : vector<8x128xf32>
    %99 = math.exp %98 : vector<8x128xf32>
    %cst_46 = arith.constant 1.000000e+00 : f32
    %100 = vector.broadcast %cst_46 : f32 to vector<8x128xf32>
    %101 = arith.addf %100, %99 : vector<8x128xf32>
    %102 = arith.divf %100, %101 : vector<8x128xf32>
    %103 = arith.select %16, %97, %102 : vector<8x128xi1>, vector<8x128xf32>
    %104 = vector.extract_strided_slice %103 {offsets = [0, 0], sizes = [8, 32], strides = [1, 1]} : vector<8x128xf32> to vector<8x32xf32>
    %105 = vector.extract_strided_slice %103 {offsets = [0, 32], sizes = [8, 32], strides = [1, 1]} : vector<8x128xf32> to vector<8x32xf32>
    %106 = vector.extract_strided_slice %103 {offsets = [0, 64], sizes = [8, 32], strides = [1, 1]} : vector<8x128xf32> to vector<8x32xf32>
    %107 = vector.extract_strided_slice %103 {offsets = [0, 96], sizes = [8, 32], strides = [1, 1]} : vector<8x128xf32> to vector<8x32xf32>
    %c0_47 = arith.constant 0 : index
    %c0_48 = arith.constant 0 : index
    %108 = vector.load %arg10[%c0_47, %c0_48] : memref<8x32xf32, #tpu.memory_space<vmem>>, vector<8x32xf32>
    %109 = arith.mulf %105, %108 : vector<8x32xf32>
    %110 = arith.mulf %104, %106 : vector<8x32xf32>
    %111 = arith.addf %109, %110 : vector<8x32xf32>
    %112 = math.tanh %111 : vector<8x32xf32>
    %113 = arith.mulf %107, %112 : vector<8x32xf32>
    %c0_49 = arith.constant 0 : index
    %c0_50 = arith.constant 0 : index
    %114 = vector.load %arg10[%c0_49, %c0_50] : memref<8x32xf32, #tpu.memory_space<vmem>>, vector<8x32xf32>
    tpu.vector_store %arg10[%c0_49, %c0_50], %111 {strides = array<i32>} : memref<8x32xf32, #tpu.memory_space<vmem>>, vector<8x32xf32>,
    %c0_51 = arith.constant 0 : index
    %c0_52 = arith.constant 0 : index
    %115 = vector.load %arg9[%c0_51, %c0_52] : memref<8x32xf32, #tpu.memory_space<vmem>>, vector<8x32xf32>
    tpu.vector_store %arg9[%c0_51, %c0_52], %113 {strides = array<i32>} : memref<8x32xf32, #tpu.memory_space<vmem>>, vector<8x32xf32>,
    %c24 = arith.constant 24 : index
    %c0_53 = arith.constant 0 : index
    %116 = vector.load %arg11[%c24, %c0_53] : memref<64x32xf32, #tpu.memory_space<vmem>>, vector<8x32xf32>
    tpu.vector_store %arg11[%c24, %c0_53], %113 {strides = array<i32>} : memref<64x32xf32, #tpu.memory_space<vmem>>, vector<8x32xf32>,
    %117 = vector.extract_strided_slice %9 {offsets = [32, 0], sizes = [8, 128], strides = [1, 1]} : vector<64x128xf32> to vector<8x128xf32>
    %c0_54 = arith.constant 0 : index
    %c0_55 = arith.constant 0 : index
    %118 = vector.load %arg9[%c0_54, %c0_55] : memref<8x32xf32, #tpu.memory_space<vmem>>, vector<8x32xf32>
    %119 = arith.truncf %118 : vector<8x32xf32> to vector<8x32xbf16>
    %cst_56 = arith.constant dense<0.000000e+00> : vector<8x128xf32>
    %120 = tpu.matmul %119, %10, %cst_56 {dimension_numbers = #tpu.dot_dimension_numbers<[1], [0], [0], [1], [0, 0, 1, 1], [], []>} : vector<8x32xbf16>, vector<32x128xbf16>, vector<8x128xf32> -> vector<8x128xf32>
    %121 = arith.addf %117, %120 : vector<8x128xf32>
    %122 = math.tanh %121 : vector<8x128xf32>
    %123 = arith.negf %121 : vector<8x128xf32>
    %124 = math.exp %123 : vector<8x128xf32>
    %cst_57 = arith.constant 1.000000e+00 : f32
    %125 = vector.broadcast %cst_57 : f32 to vector<8x128xf32>
    %126 = arith.addf %125, %124 : vector<8x128xf32>
    %127 = arith.divf %125, %126 : vector<8x128xf32>
    %128 = arith.select %16, %122, %127 : vector<8x128xi1>, vector<8x128xf32>
    %129 = vector.extract_strided_slice %128 {offsets = [0, 0], sizes = [8, 32], strides = [1, 1]} : vector<8x128xf32> to vector<8x32xf32>
    %130 = vector.extract_strided_slice %128 {offsets = [0, 32], sizes = [8, 32], strides = [1, 1]} : vector<8x128xf32> to vector<8x32xf32>
    %131 = vector.extract_strided_slice %128 {offsets = [0, 64], sizes = [8, 32], strides = [1, 1]} : vector<8x128xf32> to vector<8x32xf32>
    %132 = vector.extract_strided_slice %128 {offsets = [0, 96], sizes = [8, 32], strides = [1, 1]} : vector<8x128xf32> to vector<8x32xf32>
    %c0_58 = arith.constant 0 : index
    %c0_59 = arith.constant 0 : index
    %133 = vector.load %arg10[%c0_58, %c0_59] : memref<8x32xf32, #tpu.memory_space<vmem>>, vector<8x32xf32>
    %134 = arith.mulf %130, %133 : vector<8x32xf32>
    %135 = arith.mulf %129, %131 : vector<8x32xf32>
    %136 = arith.addf %134, %135 : vector<8x32xf32>
    %137 = math.tanh %136 : vector<8x32xf32>
    %138 = arith.mulf %132, %137 : vector<8x32xf32>
    %c0_60 = arith.constant 0 : index
    %c0_61 = arith.constant 0 : index
    %139 = vector.load %arg10[%c0_60, %c0_61] : memref<8x32xf32, #tpu.memory_space<vmem>>, vector<8x32xf32>
    tpu.vector_store %arg10[%c0_60, %c0_61], %136 {strides = array<i32>} : memref<8x32xf32, #tpu.memory_space<vmem>>, vector<8x32xf32>,
    %c0_62 = arith.constant 0 : index
    %c0_63 = arith.constant 0 : index
    %140 = vector.load %arg9[%c0_62, %c0_63] : memref<8x32xf32, #tpu.memory_space<vmem>>, vector<8x32xf32>
    tpu.vector_store %arg9[%c0_62, %c0_63], %138 {strides = array<i32>} : memref<8x32xf32, #tpu.memory_space<vmem>>, vector<8x32xf32>,
    %c32 = arith.constant 32 : index
    %c0_64 = arith.constant 0 : index
    %141 = vector.load %arg11[%c32, %c0_64] : memref<64x32xf32, #tpu.memory_space<vmem>>, vector<8x32xf32>
    tpu.vector_store %arg11[%c32, %c0_64], %138 {strides = array<i32>} : memref<64x32xf32, #tpu.memory_space<vmem>>, vector<8x32xf32>,
    %142 = vector.extract_strided_slice %9 {offsets = [40, 0], sizes = [8, 128], strides = [1, 1]} : vector<64x128xf32> to vector<8x128xf32>
    %c0_65 = arith.constant 0 : index
    %c0_66 = arith.constant 0 : index
    %143 = vector.load %arg9[%c0_65, %c0_66] : memref<8x32xf32, #tpu.memory_space<vmem>>, vector<8x32xf32>
    %144 = arith.truncf %143 : vector<8x32xf32> to vector<8x32xbf16>
    %cst_67 = arith.constant dense<0.000000e+00> : vector<8x128xf32>
    %145 = tpu.matmul %144, %10, %cst_67 {dimension_numbers = #tpu.dot_dimension_numbers<[1], [0], [0], [1], [0, 0, 1, 1], [], []>} : vector<8x32xbf16>, vector<32x128xbf16>, vector<8x128xf32> -> vector<8x128xf32>
    %146 = arith.addf %142, %145 : vector<8x128xf32>
    %147 = math.tanh %146 : vector<8x128xf32>
    %148 = arith.negf %146 : vector<8x128xf32>
    %149 = math.exp %148 : vector<8x128xf32>
    %cst_68 = arith.constant 1.000000e+00 : f32
    %150 = vector.broadcast %cst_68 : f32 to vector<8x128xf32>
    %151 = arith.addf %150, %149 : vector<8x128xf32>
    %152 = arith.divf %150, %151 : vector<8x128xf32>
    %153 = arith.select %16, %147, %152 : vector<8x128xi1>, vector<8x128xf32>
    %154 = vector.extract_strided_slice %153 {offsets = [0, 0], sizes = [8, 32], strides = [1, 1]} : vector<8x128xf32> to vector<8x32xf32>
    %155 = vector.extract_strided_slice %153 {offsets = [0, 32], sizes = [8, 32], strides = [1, 1]} : vector<8x128xf32> to vector<8x32xf32>
    %156 = vector.extract_strided_slice %153 {offsets = [0, 64], sizes = [8, 32], strides = [1, 1]} : vector<8x128xf32> to vector<8x32xf32>
    %157 = vector.extract_strided_slice %153 {offsets = [0, 96], sizes = [8, 32], strides = [1, 1]} : vector<8x128xf32> to vector<8x32xf32>
    %c0_69 = arith.constant 0 : index
    %c0_70 = arith.constant 0 : index
    %158 = vector.load %arg10[%c0_69, %c0_70] : memref<8x32xf32, #tpu.memory_space<vmem>>, vector<8x32xf32>
    %159 = arith.mulf %155, %158 : vector<8x32xf32>
    %160 = arith.mulf %154, %156 : vector<8x32xf32>
    %161 = arith.addf %159, %160 : vector<8x32xf32>
    %162 = math.tanh %161 : vector<8x32xf32>
    %163 = arith.mulf %157, %162 : vector<8x32xf32>
    %c0_71 = arith.constant 0 : index
    %c0_72 = arith.constant 0 : index
    %164 = vector.load %arg10[%c0_71, %c0_72] : memref<8x32xf32, #tpu.memory_space<vmem>>, vector<8x32xf32>
    tpu.vector_store %arg10[%c0_71, %c0_72], %161 {strides = array<i32>} : memref<8x32xf32, #tpu.memory_space<vmem>>, vector<8x32xf32>,
    %c0_73 = arith.constant 0 : index
    %c0_74 = arith.constant 0 : index
    %165 = vector.load %arg9[%c0_73, %c0_74] : memref<8x32xf32, #tpu.memory_space<vmem>>, vector<8x32xf32>
    tpu.vector_store %arg9[%c0_73, %c0_74], %163 {strides = array<i32>} : memref<8x32xf32, #tpu.memory_space<vmem>>, vector<8x32xf32>,
    %c40 = arith.constant 40 : index
    %c0_75 = arith.constant 0 : index
    %166 = vector.load %arg11[%c40, %c0_75] : memref<64x32xf32, #tpu.memory_space<vmem>>, vector<8x32xf32>
    tpu.vector_store %arg11[%c40, %c0_75], %163 {strides = array<i32>} : memref<64x32xf32, #tpu.memory_space<vmem>>, vector<8x32xf32>,
    %167 = vector.extract_strided_slice %9 {offsets = [48, 0], sizes = [8, 128], strides = [1, 1]} : vector<64x128xf32> to vector<8x128xf32>
    %c0_76 = arith.constant 0 : index
    %c0_77 = arith.constant 0 : index
    %168 = vector.load %arg9[%c0_76, %c0_77] : memref<8x32xf32, #tpu.memory_space<vmem>>, vector<8x32xf32>
    %169 = arith.truncf %168 : vector<8x32xf32> to vector<8x32xbf16>
    %cst_78 = arith.constant dense<0.000000e+00> : vector<8x128xf32>
    %170 = tpu.matmul %169, %10, %cst_78 {dimension_numbers = #tpu.dot_dimension_numbers<[1], [0], [0], [1], [0, 0, 1, 1], [], []>} : vector<8x32xbf16>, vector<32x128xbf16>, vector<8x128xf32> -> vector<8x128xf32>
    %171 = arith.addf %167, %170 : vector<8x128xf32>
    %172 = math.tanh %171 : vector<8x128xf32>
    %173 = arith.negf %171 : vector<8x128xf32>
    %174 = math.exp %173 : vector<8x128xf32>
    %cst_79 = arith.constant 1.000000e+00 : f32
    %175 = vector.broadcast %cst_79 : f32 to vector<8x128xf32>
    %176 = arith.addf %175, %174 : vector<8x128xf32>
    %177 = arith.divf %175, %176 : vector<8x128xf32>
    %178 = arith.select %16, %172, %177 : vector<8x128xi1>, vector<8x128xf32>
    %179 = vector.extract_strided_slice %178 {offsets = [0, 0], sizes = [8, 32], strides = [1, 1]} : vector<8x128xf32> to vector<8x32xf32>
    %180 = vector.extract_strided_slice %178 {offsets = [0, 32], sizes = [8, 32], strides = [1, 1]} : vector<8x128xf32> to vector<8x32xf32>
    %181 = vector.extract_strided_slice %178 {offsets = [0, 64], sizes = [8, 32], strides = [1, 1]} : vector<8x128xf32> to vector<8x32xf32>
    %182 = vector.extract_strided_slice %178 {offsets = [0, 96], sizes = [8, 32], strides = [1, 1]} : vector<8x128xf32> to vector<8x32xf32>
    %c0_80 = arith.constant 0 : index
    %c0_81 = arith.constant 0 : index
    %183 = vector.load %arg10[%c0_80, %c0_81] : memref<8x32xf32, #tpu.memory_space<vmem>>, vector<8x32xf32>
    %184 = arith.mulf %180, %183 : vector<8x32xf32>
    %185 = arith.mulf %179, %181 : vector<8x32xf32>
    %186 = arith.addf %184, %185 : vector<8x32xf32>
    %187 = math.tanh %186 : vector<8x32xf32>
    %188 = arith.mulf %182, %187 : vector<8x32xf32>
    %c0_82 = arith.constant 0 : index
    %c0_83 = arith.constant 0 : index
    %189 = vector.load %arg10[%c0_82, %c0_83] : memref<8x32xf32, #tpu.memory_space<vmem>>, vector<8x32xf32>
    tpu.vector_store %arg10[%c0_82, %c0_83], %186 {strides = array<i32>} : memref<8x32xf32, #tpu.memory_space<vmem>>, vector<8x32xf32>,
    %c0_84 = arith.constant 0 : index
    %c0_85 = arith.constant 0 : index
    %190 = vector.load %arg9[%c0_84, %c0_85] : memref<8x32xf32, #tpu.memory_space<vmem>>, vector<8x32xf32>
    tpu.vector_store %arg9[%c0_84, %c0_85], %188 {strides = array<i32>} : memref<8x32xf32, #tpu.memory_space<vmem>>, vector<8x32xf32>,
    %c48 = arith.constant 48 : index
    %c0_86 = arith.constant 0 : index
    %191 = vector.load %arg11[%c48, %c0_86] : memref<64x32xf32, #tpu.memory_space<vmem>>, vector<8x32xf32>
    tpu.vector_store %arg11[%c48, %c0_86], %188 {strides = array<i32>} : memref<64x32xf32, #tpu.memory_space<vmem>>, vector<8x32xf32>,
    %192 = vector.extract_strided_slice %9 {offsets = [56, 0], sizes = [8, 128], strides = [1, 1]} : vector<64x128xf32> to vector<8x128xf32>
    %c0_87 = arith.constant 0 : index
    %c0_88 = arith.constant 0 : index
    %193 = vector.load %arg9[%c0_87, %c0_88] : memref<8x32xf32, #tpu.memory_space<vmem>>, vector<8x32xf32>
    %194 = arith.truncf %193 : vector<8x32xf32> to vector<8x32xbf16>
    %cst_89 = arith.constant dense<0.000000e+00> : vector<8x128xf32>
    %195 = tpu.matmul %194, %10, %cst_89 {dimension_numbers = #tpu.dot_dimension_numbers<[1], [0], [0], [1], [0, 0, 1, 1], [], []>} : vector<8x32xbf16>, vector<32x128xbf16>, vector<8x128xf32> -> vector<8x128xf32>
    %196 = arith.addf %192, %195 : vector<8x128xf32>
    %197 = math.tanh %196 : vector<8x128xf32>
    %198 = arith.negf %196 : vector<8x128xf32>
    %199 = math.exp %198 : vector<8x128xf32>
    %cst_90 = arith.constant 1.000000e+00 : f32
    %200 = vector.broadcast %cst_90 : f32 to vector<8x128xf32>
    %201 = arith.addf %200, %199 : vector<8x128xf32>
    %202 = arith.divf %200, %201 : vector<8x128xf32>
    %203 = arith.select %16, %197, %202 : vector<8x128xi1>, vector<8x128xf32>
    %204 = vector.extract_strided_slice %203 {offsets = [0, 0], sizes = [8, 32], strides = [1, 1]} : vector<8x128xf32> to vector<8x32xf32>
    %205 = vector.extract_strided_slice %203 {offsets = [0, 32], sizes = [8, 32], strides = [1, 1]} : vector<8x128xf32> to vector<8x32xf32>
    %206 = vector.extract_strided_slice %203 {offsets = [0, 64], sizes = [8, 32], strides = [1, 1]} : vector<8x128xf32> to vector<8x32xf32>
    %207 = vector.extract_strided_slice %203 {offsets = [0, 96], sizes = [8, 32], strides = [1, 1]} : vector<8x128xf32> to vector<8x32xf32>
    %c0_91 = arith.constant 0 : index
    %c0_92 = arith.constant 0 : index
    %208 = vector.load %arg10[%c0_91, %c0_92] : memref<8x32xf32, #tpu.memory_space<vmem>>, vector<8x32xf32>
    %209 = arith.mulf %205, %208 : vector<8x32xf32>
    %210 = arith.mulf %204, %206 : vector<8x32xf32>
    %211 = arith.addf %209, %210 : vector<8x32xf32>
    %212 = math.tanh %211 : vector<8x32xf32>
    %213 = arith.mulf %207, %212 : vector<8x32xf32>
    %c0_93 = arith.constant 0 : index
    %c0_94 = arith.constant 0 : index
    %214 = vector.load %arg10[%c0_93, %c0_94] : memref<8x32xf32, #tpu.memory_space<vmem>>, vector<8x32xf32>
    tpu.vector_store %arg10[%c0_93, %c0_94], %211 {strides = array<i32>} : memref<8x32xf32, #tpu.memory_space<vmem>>, vector<8x32xf32>,
    %c0_95 = arith.constant 0 : index
    %c0_96 = arith.constant 0 : index
    %215 = vector.load %arg9[%c0_95, %c0_96] : memref<8x32xf32, #tpu.memory_space<vmem>>, vector<8x32xf32>
    tpu.vector_store %arg9[%c0_95, %c0_96], %213 {strides = array<i32>} : memref<8x32xf32, #tpu.memory_space<vmem>>, vector<8x32xf32>,
    %c56 = arith.constant 56 : index
    %c0_97 = arith.constant 0 : index
    %216 = vector.load %arg11[%c56, %c0_97] : memref<64x32xf32, #tpu.memory_space<vmem>>, vector<8x32xf32>
    tpu.vector_store %arg11[%c56, %c0_97], %213 {strides = array<i32>} : memref<64x32xf32, #tpu.memory_space<vmem>>, vector<8x32xf32>,
    %c0_98 = arith.constant 0 : index
    %c0_99 = arith.constant 0 : index
    %217 = vector.load %arg11[%c0_98, %c0_99] : memref<64x32xf32, #tpu.memory_space<vmem>>, vector<64x32xf32>
    %218 = arith.truncf %217 : vector<64x32xf32> to vector<64x32xbf16>
    %c0_100 = arith.constant 0 : index
    %c0_101 = arith.constant 0 : index
    %219 = vector.load %arg6[%c0_100, %c0_101] : memref<32x8xbf16, #tpu.memory_space<vmem>>, vector<32x8xbf16>
    %cst_102 = arith.constant dense<0.000000e+00> : vector<64x8xf32>
    %220 = tpu.matmul %218, %219, %cst_102 {dimension_numbers = #tpu.dot_dimension_numbers<[1], [0], [0], [1], [0, 0, 1, 1], [], []>} : vector<64x32xbf16>, vector<32x8xbf16>, vector<64x8xf32> -> vector<64x8xf32>
    %c0_103 = arith.constant 0 : index
    %c0_104 = arith.constant 0 : index
    %221 = vector.load %arg7[%c0_103, %c0_104] : memref<1x8xf32, #tpu.memory_space<vmem>>, vector<1x8xf32>
    %222 = vector.broadcast %221 : vector<1x8xf32> to vector<64x8xf32>
    %223 = arith.addf %220, %222 : vector<64x8xf32>
    %cst_105 = arith.constant dense<0xFF800000> : vector<64xf32>
    %224 = vector.multi_reduction <maximumf>, %223, %cst_105 [1] : vector<64x8xf32> to vector<64xf32>
    %225 = vector.shape_cast %224 : vector<64xf32> to vector<64x1xf32>
    %226 = vector.broadcast %225 : vector<64x1xf32> to vector<64x8xf32>
    %227 = arith.subf %223, %226 : vector<64x8xf32>
    %228 = math.exp %227 : vector<64x8xf32>
    %cst_106 = arith.constant dense<0.000000e+00> : vector<64xf32>
    %229 = vector.multi_reduction <add>, %228, %cst_106 [1] : vector<64x8xf32> to vector<64xf32>
    %230 = vector.shape_cast %229 : vector<64xf32> to vector<64x1xf32>
    %231 = math.log %230 : vector<64x1xf32>
    %232 = vector.broadcast %231 : vector<64x1xf32> to vector<64x8xf32>
    %233 = arith.subf %227, %232 : vector<64x8xf32>
    %234 = vector.shape_cast %233 : vector<64x8xf32> to vector<8x8x8xf32>
    %235 = vector.extract_strided_slice %234 {offsets = [0, 0, 0], sizes = [8, 1, 8], strides = [1, 1, 1]} : vector<8x8x8xf32> to vector<8x1x8xf32>
    %236 = vector.shape_cast %235 : vector<8x1x8xf32> to vector<8x8xf32>
    %c0_107 = arith.constant 0 : index
    %c0_108 = arith.constant 0 : index
    %237 = vector.load %arg8[%c0_107, %c0_108] : memref<8x64xf32, #tpu.memory_space<vmem>>, vector<8x8xf32>
    tpu.vector_store %arg8[%c0_107, %c0_108], %236 {strides = array<i32>} : memref<8x64xf32, #tpu.memory_space<vmem>>, vector<8x8xf32>,
    %238 = vector.extract_strided_slice %234 {offsets = [0, 1, 0], sizes = [8, 1, 8], strides = [1, 1, 1]} : vector<8x8x8xf32> to vector<8x1x8xf32>
    %239 = vector.shape_cast %238 : vector<8x1x8xf32> to vector<8x8xf32>
    %c0_109 = arith.constant 0 : index
    %c8_110 = arith.constant 8 : index
    %240 = vector.load %arg8[%c0_109, %c8_110] : memref<8x64xf32, #tpu.memory_space<vmem>>, vector<8x8xf32>
    tpu.vector_store %arg8[%c0_109, %c8_110], %239 {strides = array<i32>} : memref<8x64xf32, #tpu.memory_space<vmem>>, vector<8x8xf32>,
    %241 = vector.extract_strided_slice %234 {offsets = [0, 2, 0], sizes = [8, 1, 8], strides = [1, 1, 1]} : vector<8x8x8xf32> to vector<8x1x8xf32>
    %242 = vector.shape_cast %241 : vector<8x1x8xf32> to vector<8x8xf32>
    %c0_111 = arith.constant 0 : index
    %c16_112 = arith.constant 16 : index
    %243 = vector.load %arg8[%c0_111, %c16_112] : memref<8x64xf32, #tpu.memory_space<vmem>>, vector<8x8xf32>
    tpu.vector_store %arg8[%c0_111, %c16_112], %242 {strides = array<i32>} : memref<8x64xf32, #tpu.memory_space<vmem>>, vector<8x8xf32>,
    %244 = vector.extract_strided_slice %234 {offsets = [0, 3, 0], sizes = [8, 1, 8], strides = [1, 1, 1]} : vector<8x8x8xf32> to vector<8x1x8xf32>
    %245 = vector.shape_cast %244 : vector<8x1x8xf32> to vector<8x8xf32>
    %c0_113 = arith.constant 0 : index
    %c24_114 = arith.constant 24 : index
    %246 = vector.load %arg8[%c0_113, %c24_114] : memref<8x64xf32, #tpu.memory_space<vmem>>, vector<8x8xf32>
    tpu.vector_store %arg8[%c0_113, %c24_114], %245 {strides = array<i32>} : memref<8x64xf32, #tpu.memory_space<vmem>>, vector<8x8xf32>,
    %247 = vector.extract_strided_slice %234 {offsets = [0, 4, 0], sizes = [8, 1, 8], strides = [1, 1, 1]} : vector<8x8x8xf32> to vector<8x1x8xf32>
    %248 = vector.shape_cast %247 : vector<8x1x8xf32> to vector<8x8xf32>
    %c0_115 = arith.constant 0 : index
    %c32_116 = arith.constant 32 : index
    %249 = vector.load %arg8[%c0_115, %c32_116] : memref<8x64xf32, #tpu.memory_space<vmem>>, vector<8x8xf32>
    tpu.vector_store %arg8[%c0_115, %c32_116], %248 {strides = array<i32>} : memref<8x64xf32, #tpu.memory_space<vmem>>, vector<8x8xf32>,
    %250 = vector.extract_strided_slice %234 {offsets = [0, 5, 0], sizes = [8, 1, 8], strides = [1, 1, 1]} : vector<8x8x8xf32> to vector<8x1x8xf32>
    %251 = vector.shape_cast %250 : vector<8x1x8xf32> to vector<8x8xf32>
    %c0_117 = arith.constant 0 : index
    %c40_118 = arith.constant 40 : index
    %252 = vector.load %arg8[%c0_117, %c40_118] : memref<8x64xf32, #tpu.memory_space<vmem>>, vector<8x8xf32>
    tpu.vector_store %arg8[%c0_117, %c40_118], %251 {strides = array<i32>} : memref<8x64xf32, #tpu.memory_space<vmem>>, vector<8x8xf32>,
    %253 = vector.extract_strided_slice %234 {offsets = [0, 6, 0], sizes = [8, 1, 8], strides = [1, 1, 1]} : vector<8x8x8xf32> to vector<8x1x8xf32>
    %254 = vector.shape_cast %253 : vector<8x1x8xf32> to vector<8x8xf32>
    %c0_119 = arith.constant 0 : index
    %c48_120 = arith.constant 48 : index
    %255 = vector.load %arg8[%c0_119, %c48_120] : memref<8x64xf32, #tpu.memory_space<vmem>>, vector<8x8xf32>
    tpu.vector_store %arg8[%c0_119, %c48_120], %254 {strides = array<i32>} : memref<8x64xf32, #tpu.memory_space<vmem>>, vector<8x8xf32>,
    %256 = vector.extract_strided_slice %234 {offsets = [0, 7, 0], sizes = [8, 1, 8], strides = [1, 1, 1]} : vector<8x8x8xf32> to vector<8x1x8xf32>
    %257 = vector.shape_cast %256 : vector<8x1x8xf32> to vector<8x8xf32>
    %c0_121 = arith.constant 0 : index
    %c56_122 = arith.constant 56 : index
    %258 = vector.load %arg8[%c0_121, %c56_122] : memref<8x64xf32, #tpu.memory_space<vmem>>, vector<8x8xf32>
    tpu.vector_store %arg8[%c0_121, %c56_122], %257 {strides = array<i32>} : memref<8x64xf32, #tpu.memory_space<vmem>>, vector<8x8xf32>,
    return
  }
  func.func @transform_0(%arg0: i32, %arg1: i32) -> (i32, i32, i32) {
    %c0_i32 = arith.constant 0 : i32
    %c0_i32_0 = arith.constant 0 : i32
    return %arg1, %arg0, %c0_i32 : i32, i32, i32
  }
  func.func @transform_1(%arg0: i32, %arg1: i32) -> (i32, i32) {
    %c0_i32 = arith.constant 0 : i32
    %c0_i32_0 = arith.constant 0 : i32
    %c0_i32_1 = arith.constant 0 : i32
    return %c0_i32, %c0_i32_0 : i32, i32
  }
  func.func @transform_2(%arg0: i32, %arg1: i32) -> (i32, i32) {
    %c0_i32 = arith.constant 0 : i32
    %c0_i32_0 = arith.constant 0 : i32
    %c0_i32_1 = arith.constant 0 : i32
    return %c0_i32, %c0_i32_0 : i32, i32
  }
  func.func @transform_3(%arg0: i32, %arg1: i32) -> (i32, i32) {
    %c0_i32 = arith.constant 0 : i32
    %c0_i32_0 = arith.constant 0 : i32
    %c0_i32_1 = arith.constant 0 : i32
    return %c0_i32, %c0_i32_0 : i32, i32
  }
  func.func @transform_4(%arg0: i32, %arg1: i32) -> (i32, i32) {
    %c0_i32 = arith.constant 0 : i32
    %c0_i32_0 = arith.constant 0 : i32
    %c0_i32_1 = arith.constant 0 : i32
    return %c0_i32, %c0_i32_0 : i32, i32
  }
  func.func @transform_5(%arg0: i32, %arg1: i32) -> (i32, i32) {
    %c0_i32 = arith.constant 0 : i32
    %c0_i32_0 = arith.constant 0 : i32
    %c0_i32_1 = arith.constant 0 : i32
    return %c0_i32, %c0_i32_0 : i32, i32
  }
  func.func @transform_6(%arg0: i32, %arg1: i32) -> (i32, i32) {
    %c0_i32 = arith.constant 0 : i32
    return %arg1, %arg0 : i32, i32
  }
}

</mosaic_0001>

<llo_original>
// kernel: lstm_model_forward.1
$region0: #{lstm_model_forward.1}
  #allocation0 [shape = 'u32[]', space=smem, size = 0x4, offset = 0x4, fixed_abs, tag = 'smem constant byte address 0x4 - core index']
  #allocation1 [shape = 'u32[144,128]{1,0:T(1,128)}', space=vmem, size = 0x12000, scoped, tag = 'internal scratch']
  #allocation2 [shape = 'f32[8,32]{1,0:T(8,128)}', space=vmem, size = 0x1000, scoped, tag = 'scratch operand']
  #allocation3 [shape = 'f32[8,32]{1,0:T(8,128)}', space=vmem, size = 0x1000, scoped, tag = 'scratch operand']
  #allocation4 [shape = 'f32[64,32]{1,0:T(8,128)}', space=vmem, size = 0x8000, scoped, tag = 'scratch operand']
  %s0 = inlined_call_operand.vmem [shape: bf16[8,8,16], index: 0, kind: input, shape index: {}]
  %s1 = inlined_call_operand.vmem [shape: bf16[16,128], index: 1, kind: input, shape index: {}]
  %s2 = inlined_call_operand.vmem [shape: f32[1,128], index: 2, kind: input, shape index: {}]
  %s3 = inlined_call_operand.vmem [shape: bf16[32,128], index: 3, kind: input, shape index: {}]
  %s4 = inlined_call_operand.vmem [shape: bf16[32,8], index: 4, kind: input, shape index: {}]
  %s5 = inlined_call_operand.vmem [shape: f32[1,8], index: 5, kind: input, shape index: {}]
  %s6 = inlined_call_operand.vmem [shape: f32[8,64], index: 6, kind: output, shape index: {}]
  %s7 = sld [smem:[#allocation0]]
  $region38: #{lstm_model_forward.1} parent=0
    _
  %s9 = ssub.s32 1, %s7
  %s10 = scalar_select 0, %s9, %s7
  // Predicated region
  $region2: #{lstm_model_forward.1} parent=0 // pred_check
    _
  $region3: #{lstm_model_forward.1} parent=0 // pred_check_branch
    %12 = sbr.rel (0) target = $region5
  $region4: #{lstm_model_forward.1} parent=0 // pred_region
    _
  $region5: #{lstm_model_forward.1} parent=0 // pred_fallthru
    _
  // Predicated region
  $region6: #{lstm_model_forward.1} parent=0 // pred_check
    _
  $region7: #{lstm_model_forward.1} parent=0 // pred_check_branch
    %14 = sbr.rel (0) target = $region9
  $region8: #{lstm_model_forward.1} parent=0 // pred_region
    _
  $region9: #{lstm_model_forward.1} parent=0 // pred_fallthru
    _
  // Predicated region
  $region10: #{lstm_model_forward.1} parent=0 // pred_check
    _
  $region11: #{lstm_model_forward.1} parent=0 // pred_check_branch
    %16 = sbr.rel (0) target = $region13
  $region12: #{lstm_model_forward.1} parent=0 // pred_region
    _
  $region13: #{lstm_model_forward.1} parent=0 // pred_fallthru
    _
  // Predicated region
  $region14: #{lstm_model_forward.1} parent=0 // pred_check
    _
  $region15: #{lstm_model_forward.1} parent=0 // pred_check_branch
    %18 = sbr.rel (0) target = $region17
  $region16: #{lstm_model_forward.1} parent=0 // pred_region
    _
  $region17: #{lstm_model_forward.1} parent=0 // pred_fallthru
    _
  // Predicated region
  $region18: #{lstm_model_forward.1} parent=0 // pred_check
    _
  $region19: #{lstm_model_forward.1} parent=0 // pred_check_branch
    %20 = sbr.rel (0) target = $region21
  $region20: #{lstm_model_forward.1} parent=0 // pred_region
    _
  $region21: #{lstm_model_forward.1} parent=0 // pred_fallthru
    _
  // Predicated region
  $region22: #{lstm_model_forward.1} parent=0 // pred_check
    _
  $region23: #{lstm_model_forward.1} parent=0 // pred_check_branch
    %22 = sbr.rel (0) target = $region25
  $region24: #{lstm_model_forward.1} parent=0 // pred_region
    _
  $region25: #{lstm_model_forward.1} parent=0 // pred_fallthru
    _
  %p24 = scmp.eq.s32.totalorder 0, 0
  // Predicated region
  $region26: #{lstm_model_forward.1} parent=0 // pred_check
    %p25 = pneg %p24
  $region27: #{lstm_model_forward.1} parent=0 // pred_check_branch
    %27 = sbr.rel (%p25) target = $region29
  $region28: #{lstm_model_forward.1} parent=0 // pred_region
    %vm28 = vcmask 261120
    %29 = vst.msk [vmem:[#allocation2] sm:$0xff] %vm28, 0.0
    %30 = vst.msk [vmem:[#allocation3] sm:$0xff] %vm28, 0.0
  $region29: #{lstm_model_forward.1} parent=0 // pred_fallthru
    _
  %v31 = vld [vmem:[%s0] sm:$0xf]
  %v32 = vld [vmem:[%s0 + $0x4] sm:$0xf]
  %v33 = vld [vmem:[%s0 + $0x8] sm:$0xf]
  %v34 = vld [vmem:[%s0 + $0xc] sm:$0xf]
  %v35 = vld [vmem:[%s0 + $0x10] sm:$0xf]
  %v36 = vld [vmem:[%s0 + $0x14] sm:$0xf]
  %v37 = vld [vmem:[%s0 + $0x18] sm:$0xf]
  %v38 = vld [vmem:[%s0 + $0x1c] sm:$0xf]
  %v39 = vld [vmem:[%s1] sm:$0xf]
  %v40 = vld [vmem:[%s1 + $0x4] sm:$0xf]
  %v41 = vld [vmem:[%s2] sm:$0x1]
  %v43 = vlaneseq
  %v44 = vshrl.u32 %v43, 7
  %v45 = vsub.s32 0, %v44
  %v46 = vrot.slane %v41, %v45
  %v56 = vunpack.c.l.b16 %v31
  %v57 = vunpack.c.l.b16 %v32
  %v58 = vunpack.c.l.b16 %v33
  %v59 = vunpack.c.l.b16 %v34
  %v60 = vunpack.c.l.b16 %v35
  %v61 = vunpack.c.l.b16 %v36
  %v62 = vunpack.c.l.b16 %v37
  %v63 = vunpack.c.l.b16 %v38
  %v64 = vpack.c.b16 %v57, %v56
  %v65 = vpack.c.b16 %v59, %v58
  %v66 = vpack.c.b16 %v61, %v60
  %v67 = vpack.c.b16 %v63, %v62
  %v70 = vunpack.c.l.b16 %v39
  %v71 = vunpack.c.l.b16 %v40
  %v72 = vpack.c.b16 %v71, %v70
  %vm74 = vcmask 130048
  %v76 = vsel %vm74, %v64, 0
  %v79 = vsel %vm74, %v65, 0
  %v82 = vsel %vm74, %v66, 0
  %v85 = vsel %vm74, %v67, 0
  %87 = vmatprep.subr.bf16.mxu0 0
  %88 = vmatpush1.bf16.msra.mxu0 %v72
  %89 = vmatprep.subr.bf16.mxu0 0
  %90 = vmatpush1.bf16.msra.mxu0 0
  %91 = vmatprep.subr.bf16.mxu0 0
  %92 = vmatpush1.bf16.msra.mxu0 0
  %93 = vmatprep.subr.bf16.mxu0 0
  %94 = vmatpush1.bf16.msra.mxu0 0
  %95 = vmatprep.subr.bf16.mxu0 0
  %96 = vmatpush1.bf16.msra.mxu0 0
  %97 = vmatprep.subr.bf16.mxu0 0
  %98 = vmatpush1.bf16.msra.mxu0 0
  %99 = vmatprep.subr.bf16.mxu0 0
  %100 = vmatpush1.bf16.msra.mxu0 0
  %101 = vmatprep.subr.bf16.mxu0 0
  %102 = vmatpush1.bf16.msra.mxu0 0
  %103 = vmatprep.subr.bf16.mxu0 0
  %104 = vmatpush1.bf16.msra.mxu0 0
  %105 = vmatprep.subr.bf16.mxu0 0
  %106 = vmatpush1.bf16.msra.mxu0 0
  %107 = vmatprep.subr.bf16.mxu0 0
  %108 = vmatpush1.bf16.msra.mxu0 0
  %109 = vmatprep.subr.bf16.mxu0 0
  %110 = vmatpush1.bf16.msra.mxu0 0
  %111 = vmatprep.subr.bf16.mxu0 0
  %112 = vmatpush1.bf16.msra.mxu0 0
  %113 = vmatprep.subr.bf16.mxu0 0
  %114 = vmatpush1.bf16.msra.mxu0 0
  %115 = vmatprep.subr.bf16.mxu0 0
  %116 = vmatpush1.bf16.msra.mxu0 0
  %117 = vmatprep.subr.bf16.mxu0 0
  %118 = vmatpush1.bf16.msra.mxu0 0
  %119 = vmatprep.mubr.bf16.mxu0 0
  %120 = vmatmul.mubr.bf16.gmra.mrb[0].mxu0 %v76
  %v121 = vpop.f32.mrb[0].mxu0
  %v122 = vadd.f32 %v46, %v121
  %v123 = vpop.f32.mrb[0].mxu0
  %v124 = vpop.f32.mrb[0].mxu0
  %v125 = vadd.f32 %v46, %v124
  %v126 = vpop.f32.mrb[0].mxu0
  %127 = vmatprep.mubr.bf16.mxu0 0
  %128 = vmatmul.mubr.bf16.gmra.mrb[0].mxu0 %v79
  %v129 = vpop.f32.mrb[0].mxu0
  %v130 = vadd.f32 %v46, %v129
  %v131 = vpop.f32.mrb[0].mxu0
  %v132 = vpop.f32.mrb[0].mxu0
  %v133 = vadd.f32 %v46, %v132
  %v134 = vpop.f32.mrb[0].mxu0
  %135 = vmatprep.mubr.bf16.mxu0 0
  %136 = vmatmul.mubr.bf16.gmra.mrb[0].mxu0 %v82
  %v137 = vpop.f32.mrb[0].mxu0
  %v138 = vadd.f32 %v46, %v137
  %v139 = vpop.f32.mrb[0].mxu0
  %v140 = vpop.f32.mrb[0].mxu0
  %v141 = vadd.f32 %v46, %v140
  %v142 = vpop.f32.mrb[0].mxu0
  %143 = vmatprep.mubr.bf16.mxu0 0
  %144 = vmatmul.mubr.bf16.gmra.mrb[0].mxu0 %v85
  %v145 = vpop.f32.mrb[0].mxu0
  %v146 = vadd.f32 %v46, %v145
  %v147 = vpop.f32.mrb[0].mxu0
  %v148 = vpop.f32.mrb[0].mxu0
  %v149 = vadd.f32 %v46, %v148
  %v150 = vpop.f32.mrb[0].mxu0
  %151 = vdwg.mxu0
  %v152 = vld [vmem:[%s3] sm:$0xf]
  %v153 = vld [vmem:[%s3 + $0x4] sm:$0xf]
  %v154 = vld [vmem:[%s3 + $0x8] sm:$0xf]
  %v155 = vld [vmem:[%s3 + $0xc] sm:$0xf]
  %v156 = vlaneseq
  %v157 = vand.u32 %v156, 127
  %vm158 = vcmp.ge.s32.totalorder %v157, 64
  %vm159 = vcmp.lt.s32.totalorder %v157, 96
  %vm160 = vmand %vm158, %vm159
  %v161 = vld [vmem:[#allocation2] sm:$0xff]
  %v162 = vpack.c.bf16 %v161, %v161
  %v167 = vunpack.c.l.b16 %v152
  %v168 = vunpack.c.l.b16 %v153
  %v169 = vunpack.c.l.b16 %v154
  %v170 = vunpack.c.l.b16 %v155
  %v171 = vpack.c.b16 %v168, %v167
  %v172 = vpack.c.b16 %v170, %v169
  %vm175 = vcmask 261120
  %v177 = vsel %vm175, %v162, 0
  %179 = vmatprep.subr.bf16.mxu0 0
  %180 = vmatpush1.bf16.msra.mxu0 %v171
  %181 = vmatprep.subr.bf16.mxu0 0
  %182 = vmatpush1.bf16.msra.mxu0 %v172
  %183 = vmatprep.subr.bf16.mxu0 0
  %184 = vmatpush1.bf16.msra.mxu0 0
  %185 = vmatprep.subr.bf16.mxu0 0
  %186 = vmatpush1.bf16.msra.mxu0 0
  %187 = vmatprep.subr.bf16.mxu0 0
  %188 = vmatpush1.bf16.msra.mxu0 0
  %189 = vmatprep.subr.bf16.mxu0 0
  %190 = vmatpush1.bf16.msra.mxu0 0
  %191 = vmatprep.subr.bf16.mxu0 0
  %192 = vmatpush1.bf16.msra.mxu0 0
  %193 = vmatprep.subr.bf16.mxu0 0
  %194 = vmatpush1.bf16.msra.mxu0 0
  %195 = vmatprep.subr.bf16.mxu0 0
  %196 = vmatpush1.bf16.msra.mxu0 0
  %197 = vmatprep.subr.bf16.mxu0 0
  %198 = vmatpush1.bf16.msra.mxu0 0
  %199 = vmatprep.subr.bf16.mxu0 0
  %200 = vmatpush1.bf16.msra.mxu0 0
  %201 = vmatprep.subr.bf16.mxu0 0
  %202 = vmatpush1.bf16.msra.mxu0 0
  %203 = vmatprep.subr.bf16.mxu0 0
  %204 = vmatpush1.bf16.msra.mxu0 0
  %205 = vmatprep.subr.bf16.mxu0 0
  %206 = vmatpush1.bf16.msra.mxu0 0
  %207 = vmatprep.subr.bf16.mxu0 0
  %208 = vmatpush1.bf16.msra.mxu0 0
  %209 = vmatprep.subr.bf16.mxu0 0
  %210 = vmatpush1.bf16.msra.mxu0 0
  %211 = vmatprep.mubr.bf16.mxu0 0
  %212 = vmatmul.mubr.bf16.gmra.mrb[0].mxu0 %v177
  %v213 = vpop.f32.mrb[0].mxu0
  %v214 = vadd.f32 0.0, %v213
  %v215 = vpop.f32.mrb[0].mxu0
  %v216 = vpop.f32.mrb[0].mxu0
  %v217 = vpop.f32.mrb[0].mxu0
  %218 = vdwg.mxu0
  %v219 = vadd.f32 %v122, %v214
  %v220 = vtanh.pop %v219
  %v221 = vxor.u32 %v219, 2147483648
  %v222 = vmul.f32 %v221, 1.442695
  %v223 = vpow.pop %v222
  %v224 = vadd.f32 %v223, 1.0
  %v225 = vrcp.pop %v224
  %v226 = vmul.f32 1.0, %v225
  %v227 = vsel %vm160, %v220, %v226
  %v228 = vld [vmem:[#allocation3] sm:$0xff]
  %230 = vrot.lane.b32.xlu0 %v228, 32
  %v231 = vpop.permute.xlu0 %230
  %v233 = vmul.f32 %v227, %v231
  %235 = vrot.lane.b32.xlu0 %v227, 64
  %v236 = vpop.permute.xlu0 %235
  %v238 = vmul.f32 %v227, %v236
  %240 = vrot.lane.b32.xlu0 %v238, 32
  %v241 = vpop.permute.xlu0 %240
  %v243 = vadd.f32 %v233, %v241
  %v244 = vtanh.pop %v243
  %246 = vrot.lane.b32.xlu0 %v244, 64
  %v247 = vpop.permute.xlu0 %246
  %v249 = vmul.f32 %v227, %v247
  %251 = vrot.lane.b32.xlu0 %v243, 96
  %v252 = vpop.permute.xlu0 %251
  %254 = vst.msk [vmem:[#allocation3] sm:$0xff] %vm175, %v252
  %256 = vrot.lane.b32.xlu0 %v249, 32
  %v257 = vpop.permute.xlu0 %256
  %259 = vst.msk [vmem:[#allocation2] sm:$0xff] %vm175, %v257
  %260 = vst.msk [vmem:[#allocation4] sm:$0xff] %vm175, %v257
  %v261 = vld [vmem:[#allocation2] sm:$0xff]
  %v262 = vpack.c.bf16 %v261, %v261
  %v264 = vsel %vm175, %v262, 0
  %266 = vmatprep.subr.bf16.mxu0 0
  %267 = vmatpush1.bf16.msra.mxu0 %v171
  %268 = vmatprep.subr.bf16.mxu0 0
  %269 = vmatpush1.bf16.msra.mxu0 %v172
  %270 = vmatprep.subr.bf16.mxu0 0
  %271 = vmatpush1.bf16.msra.mxu0 0
  %272 = vmatprep.subr.bf16.mxu0 0
  %273 = vmatpush1.bf16.msra.mxu0 0
  %274 = vmatprep.subr.bf16.mxu0 0
  %275 = vmatpush1.bf16.msra.mxu0 0
  %276 = vmatprep.subr.bf16.mxu0 0
  %277 = vmatpush1.bf16.msra.mxu0 0
  %278 = vmatprep.subr.bf16.mxu0 0
  %279 = vmatpush1.bf16.msra.mxu0 0
  %280 = vmatprep.subr.bf16.mxu0 0
  %281 = vmatpush1.bf16.msra.mxu0 0
  %282 = vmatprep.subr.bf16.mxu0 0
  %283 = vmatpush1.bf16.msra.mxu0 0
  %284 = vmatprep.subr.bf16.mxu0 0
  %285 = vmatpush1.bf16.msra.mxu0 0
  %286 = vmatprep.subr.bf16.mxu0 0
  %287 = vmatpush1.bf16.msra.mxu0 0
  %288 = vmatprep.subr.bf16.mxu0 0
  %289 = vmatpush1.bf16.msra.mxu0 0
  %290 = vmatprep.subr.bf16.mxu0 0
  %291 = vmatpush1.bf16.msra.mxu0 0
  %292 = vmatprep.subr.bf16.mxu0 0
  %293 = vmatpush1.bf16.msra.mxu0 0
  %294 = vmatprep.subr.bf16.mxu0 0
  %295 = vmatpush1.bf16.msra.mxu0 0
  %296 = vmatprep.subr.bf16.mxu0 0
  %297 = vmatpush1.bf16.msra.mxu0 0
  %298 = vmatprep.mubr.bf16.mxu0 0
  %299 = vmatmul.mubr.bf16.gmra.mrb[0].mxu0 %v264
  %v300 = vpop.f32.mrb[0].mxu0
  %v301 = vadd.f32 0.0, %v300
  %v302 = vpop.f32.mrb[0].mxu0
  %v303 = vpop.f32.mrb[0].mxu0
  %v304 = vpop.f32.mrb[0].mxu0
  %305 = vdwg.mxu0
  %v306 = vadd.f32 %v125, %v301
  %v307 = vtanh.pop %v306
  %v308 = vxor.u32 %v306, 2147483648
  %v309 = vmul.f32 %v308, 1.442695
  %v310 = vpow.pop %v309
  %v311 = vadd.f32 %v310, 1.0
  %v312 = vrcp.pop %v311
  %v313 = vmul.f32 1.0, %v312
  %v314 = vsel %vm160, %v307, %v313
  %v315 = vld [vmem:[#allocation3] sm:$0xff]
  %317 = vrot.lane.b32.xlu0 %v315, 32
  %v318 = vpop.permute.xlu0 %317
  %v320 = vmul.f32 %v314, %v318
  %322 = vrot.lane.b32.xlu0 %v314, 64
  %v323 = vpop.permute.xlu0 %322
  %v325 = vmul.f32 %v314, %v323
  %327 = vrot.lane.b32.xlu0 %v325, 32
  %v328 = vpop.permute.xlu0 %327
  %v330 = vadd.f32 %v320, %v328
  %v331 = vtanh.pop %v330
  %333 = vrot.lane.b32.xlu0 %v331, 64
  %v334 = vpop.permute.xlu0 %333
  %v336 = vmul.f32 %v314, %v334
  %338 = vrot.lane.b32.xlu0 %v330, 96
  %v339 = vpop.permute.xlu0 %338
  %341 = vst.msk [vmem:[#allocation3] sm:$0xff] %vm175, %v339
  %343 = vrot.lane.b32.xlu0 %v336, 32
  %v344 = vpop.permute.xlu0 %343
  %346 = vst.msk [vmem:[#allocation2] sm:$0xff] %vm175, %v344
  %347 = vst.msk [vmem:[#allocation4 + $0x8] sm:$0xff] %vm175, %v344
  %v348 = vld [vmem:[#allocation2] sm:$0xff]
  %v349 = vpack.c.bf16 %v348, %v348
  %v351 = vsel %vm175, %v349, 0
  %353 = vmatprep.subr.bf16.mxu0 0
  %354 = vmatpush1.bf16.msra.mxu0 %v171
  %355 = vmatprep.subr.bf16.mxu0 0
  %356 = vmatpush1.bf16.msra.mxu0 %v172
  %357 = vmatprep.subr.bf16.mxu0 0
  %358 = vmatpush1.bf16.msra.mxu0 0
  %359 = vmatprep.subr.bf16.mxu0 0
  %360 = vmatpush1.bf16.msra.mxu0 0
  %361 = vmatprep.subr.bf16.mxu0 0
  %362 = vmatpush1.bf16.msra.mxu0 0
  %363 = vmatprep.subr.bf16.mxu0 0
  %364 = vmatpush1.bf16.msra.mxu0 0
  %365 = vmatprep.subr.bf16.mxu0 0
  %366 = vmatpush1.bf16.msra.mxu0 0
  %367 = vmatprep.subr.bf16.mxu0 0
  %368 = vmatpush1.bf16.msra.mxu0 0
  %369 = vmatprep.subr.bf16.mxu0 0
  %370 = vmatpush1.bf16.msra.mxu0 0
  %371 = vmatprep.subr.bf16.mxu0 0
  %372 = vmatpush1.bf16.msra.mxu0 0
  %373 = vmatprep.subr.bf16.mxu0 0
  %374 = vmatpush1.bf16.msra.mxu0 0
  %375 = vmatprep.subr.bf16.mxu0 0
  %376 = vmatpush1.bf16.msra.mxu0 0
  %377 = vmatprep.subr.bf16.mxu0 0
  %378 = vmatpush1.bf16.msra.mxu0 0
  %379 = vmatprep.subr.bf16.mxu0 0
  %380 = vmatpush1.bf16.msra.mxu0 0
  %381 = vmatprep.subr.bf16.mxu0 0
  %382 = vmatpush1.bf16.msra.mxu0 0
  %383 = vmatprep.subr.bf16.mxu0 0
  %384 = vmatpush1.bf16.msra.mxu0 0
  %385 = vmatprep.mubr.bf16.mxu0 0
  %386 = vmatmul.mubr.bf16.gmra.mrb[0].mxu0 %v351
  %v387 = vpop.f32.mrb[0].mxu0
  %v388 = vadd.f32 0.0, %v387
  %v389 = vpop.f32.mrb[0].mxu0
  %v390 = vpop.f32.mrb[0].mxu0
  %v391 = vpop.f32.mrb[0].mxu0
  %392 = vdwg.mxu0
  %v393 = vadd.f32 %v130, %v388
  %v394 = vtanh.pop %v393
  %v395 = vxor.u32 %v393, 2147483648
  %v396 = vmul.f32 %v395, 1.442695
  %v397 = vpow.pop %v396
  %v398 = vadd.f32 %v397, 1.0
  %v399 = vrcp.pop %v398
  %v400 = vmul.f32 1.0, %v399
  %v401 = vsel %vm160, %v394, %v400
  %v402 = vld [vmem:[#allocation3] sm:$0xff]
  %404 = vrot.lane.b32.xlu0 %v402, 32
  %v405 = vpop.permute.xlu0 %404
  %v407 = vmul.f32 %v401, %v405
  %409 = vrot.lane.b32.xlu0 %v401, 64
  %v410 = vpop.permute.xlu0 %409
  %v412 = vmul.f32 %v401, %v410
  %414 = vrot.lane.b32.xlu0 %v412, 32
  %v415 = vpop.permute.xlu0 %414
  %v417 = vadd.f32 %v407, %v415
  %v418 = vtanh.pop %v417
  %420 = vrot.lane.b32.xlu0 %v418, 64
  %v421 = vpop.permute.xlu0 %420
  %v423 = vmul.f32 %v401, %v421
  %425 = vrot.lane.b32.xlu0 %v417, 96
  %v426 = vpop.permute.xlu0 %425
  %428 = vst.msk [vmem:[#allocation3] sm:$0xff] %vm175, %v426
  %430 = vrot.lane.b32.xlu0 %v423, 32
  %v431 = vpop.permute.xlu0 %430
  %433 = vst.msk [vmem:[#allocation2] sm:$0xff] %vm175, %v431
  %434 = vst.msk [vmem:[#allocation4 + $0x10] sm:$0xff] %vm175, %v431
  %v435 = vld [vmem:[#allocation2] sm:$0xff]
  %v436 = vpack.c.bf16 %v435, %v435
  %v438 = vsel %vm175, %v436, 0
  %440 = vmatprep.subr.bf16.mxu0 0
  %441 = vmatpush1.bf16.msra.mxu0 %v171
  %442 = vmatprep.subr.bf16.mxu0 0
  %443 = vmatpush1.bf16.msra.mxu0 %v172
  %444 = vmatprep.subr.bf16.mxu0 0
  %445 = vmatpush1.bf16.msra.mxu0 0
  %446 = vmatprep.subr.bf16.mxu0 0
  %447 = vmatpush1.bf16.msra.mxu0 0
  %448 = vmatprep.subr.bf16.mxu0 0
  %449 = vmatpush1.bf16.msra.mxu0 0
  %450 = vmatprep.subr.bf16.mxu0 0
  %451 = vmatpush1.bf16.msra.mxu0 0
  %452 = vmatprep.subr.bf16.mxu0 0
  %453 = vmatpush1.bf16.msra.mxu0 0
  %454 = vmatprep.subr.bf16.mxu0 0
  %455 = vmatpush1.bf16.msra.mxu0 0
  %456 = vmatprep.subr.bf16.mxu0 0
  %457 = vmatpush1.bf16.msra.mxu0 0
  %458 = vmatprep.subr.bf16.mxu0 0
  %459 = vmatpush1.bf16.msra.mxu0 0
  %460 = vmatprep.subr.bf16.mxu0 0
  %461 = vmatpush1.bf16.msra.mxu0 0
  %462 = vmatprep.subr.bf16.mxu0 0
  %463 = vmatpush1.bf16.msra.mxu0 0
  %464 = vmatprep.subr.bf16.mxu0 0
  %465 = vmatpush1.bf16.msra.mxu0 0
  %466 = vmatprep.subr.bf16.mxu0 0
  %467 = vmatpush1.bf16.msra.mxu0 0
  %468 = vmatprep.subr.bf16.mxu0 0
  %469 = vmatpush1.bf16.msra.mxu0 0
  %470 = vmatprep.subr.bf16.mxu0 0
  %471 = vmatpush1.bf16.msra.mxu0 0
  %472 = vmatprep.mubr.bf16.mxu0 0
  %473 = vmatmul.mubr.bf16.gmra.mrb[0].mxu0 %v438
  %v474 = vpop.f32.mrb[0].mxu0
  %v475 = vadd.f32 0.0, %v474
  %v476 = vpop.f32.mrb[0].mxu0
  %v477 = vpop.f32.mrb[0].mxu0
  %v478 = vpop.f32.mrb[0].mxu0
  %479 = vdwg.mxu0
  %v480 = vadd.f32 %v133, %v475
  %v481 = vtanh.pop %v480
  %v482 = vxor.u32 %v480, 2147483648
  %v483 = vmul.f32 %v482, 1.442695
  %v484 = vpow.pop %v483
  %v485 = vadd.f32 %v484, 1.0
  %v486 = vrcp.pop %v485
  %v487 = vmul.f32 1.0, %v486
  %v488 = vsel %vm160, %v481, %v487
  %v489 = vld [vmem:[#allocation3] sm:$0xff]
  %491 = vrot.lane.b32.xlu0 %v489, 32
  %v492 = vpop.permute.xlu0 %491
  %v494 = vmul.f32 %v488, %v492
  %496 = vrot.lane.b32.xlu0 %v488, 64
  %v497 = vpop.permute.xlu0 %496
  %v499 = vmul.f32 %v488, %v497
  %501 = vrot.lane.b32.xlu0 %v499, 32
  %v502 = vpop.permute.xlu0 %501
  %v504 = vadd.f32 %v494, %v502
  %v505 = vtanh.pop %v504
  %507 = vrot.lane.b32.xlu0 %v505, 64
  %v508 = vpop.permute.xlu0 %507
  %v510 = vmul.f32 %v488, %v508
  %512 = vrot.lane.b32.xlu0 %v504, 96
  %v513 = vpop.permute.xlu0 %512
  %515 = vst.msk [vmem:[#allocation3] sm:$0xff] %vm175, %v513
  %517 = vrot.lane.b32.xlu0 %v510, 32
  %v518 = vpop.permute.xlu0 %517
  %520 = vst.msk [vmem:[#allocation2] sm:$0xff] %vm175, %v518
  %521 = vst.msk [vmem:[#allocation4 + $0x18] sm:$0xff] %vm175, %v518
  %v522 = vld [vmem:[#allocation2] sm:$0xff]
  %v523 = vpack.c.bf16 %v522, %v522
  %v525 = vsel %vm175, %v523, 0
  %527 = vmatprep.subr.bf16.mxu0 0
  %528 = vmatpush1.bf16.msra.mxu0 %v171
  %529 = vmatprep.subr.bf16.mxu0 0
  %530 = vmatpush1.bf16.msra.mxu0 %v172
  %531 = vmatprep.subr.bf16.mxu0 0
  %532 = vmatpush1.bf16.msra.mxu0 0
  %533 = vmatprep.subr.bf16.mxu0 0
  %534 = vmatpush1.bf16.msra.mxu0 0
  %535 = vmatprep.subr.bf16.mxu0 0
  %536 = vmatpush1.bf16.msra.mxu0 0
  %537 = vmatprep.subr.bf16.mxu0 0
  %538 = vmatpush1.bf16.msra.mxu0 0
  %539 = vmatprep.subr.bf16.mxu0 0
  %540 = vmatpush1.bf16.msra.mxu0 0
  %541 = vmatprep.subr.bf16.mxu0 0
  %542 = vmatpush1.bf16.msra.mxu0 0
  %543 = vmatprep.subr.bf16.mxu0 0
  %544 = vmatpush1.bf16.msra.mxu0 0
  %545 = vmatprep.subr.bf16.mxu0 0
  %546 = vmatpush1.bf16.msra.mxu0 0
  %547 = vmatprep.subr.bf16.mxu0 0
  %548 = vmatpush1.bf16.msra.mxu0 0
  %549 = vmatprep.subr.bf16.mxu0 0
  %550 = vmatpush1.bf16.msra.mxu0 0
  %551 = vmatprep.subr.bf16.mxu0 0
  %552 = vmatpush1.bf16.msra.mxu0 0
  %553 = vmatprep.subr.bf16.mxu0 0
  %554 = vmatpush1.bf16.msra.mxu0 0
  %555 = vmatprep.subr.bf16.mxu0 0
  %556 = vmatpush1.bf16.msra.mxu0 0
  %557 = vmatprep.subr.bf16.mxu0 0
  %558 = vmatpush1.bf16.msra.mxu0 0
  %559 = vmatprep.mubr.bf16.mxu0 0
  %560 = vmatmul.mubr.bf16.gmra.mrb[0].mxu0 %v525
  %v561 = vpop.f32.mrb[0].mxu0
  %v562 = vadd.f32 0.0, %v561
  %v563 = vpop.f32.mrb[0].mxu0
  %v564 = vpop.f32.mrb[0].mxu0
  %v565 = vpop.f32.mrb[0].mxu0
  %566 = vdwg.mxu0
  %v567 = vadd.f32 %v138, %v562
  %v568 = vtanh.pop %v567
  %v569 = vxor.u32 %v567, 2147483648
  %v570 = vmul.f32 %v569, 1.442695
  %v571 = vpow.pop %v570
  %v572 = vadd.f32 %v571, 1.0
  %v573 = vrcp.pop %v572
  %v574 = vmul.f32 1.0, %v573
  %v575 = vsel %vm160, %v568, %v574
  %v576 = vld [vmem:[#allocation3] sm:$0xff]
  %578 = vrot.lane.b32.xlu0 %v576, 32
  %v579 = vpop.permute.xlu0 %578
  %v581 = vmul.f32 %v575, %v579
  %583 = vrot.lane.b32.xlu0 %v575, 64
  %v584 = vpop.permute.xlu0 %583
  %v586 = vmul.f32 %v575, %v584
  %588 = vrot.lane.b32.xlu0 %v586, 32
  %v589 = vpop.permute.xlu0 %588
  %v591 = vadd.f32 %v581, %v589
  %v592 = vtanh.pop %v591
  %594 = vrot.lane.b32.xlu0 %v592, 64
  %v595 = vpop.permute.xlu0 %594
  %v597 = vmul.f32 %v575, %v595
  %599 = vrot.lane.b32.xlu0 %v591, 96
  %v600 = vpop.permute.xlu0 %599
  %602 = vst.msk [vmem:[#allocation3] sm:$0xff] %vm175, %v600
  %604 = vrot.lane.b32.xlu0 %v597, 32
  %v605 = vpop.permute.xlu0 %604
  %607 = vst.msk [vmem:[#allocation2] sm:$0xff] %vm175, %v605
  %608 = vst.msk [vmem:[#allocation4 + $0x20] sm:$0xff] %vm175, %v605
  %v609 = vld [vmem:[#allocation2] sm:$0xff]
  %v610 = vpack.c.bf16 %v609, %v609
  %v612 = vsel %vm175, %v610, 0
  %614 = vmatprep.subr.bf16.mxu0 0
  %615 = vmatpush1.bf16.msra.mxu0 %v171
  %616 = vmatprep.subr.bf16.mxu0 0
  %617 = vmatpush1.bf16.msra.mxu0 %v172
  %618 = vmatprep.subr.bf16.mxu0 0
  %619 = vmatpush1.bf16.msra.mxu0 0
  %620 = vmatprep.subr.bf16.mxu0 0
  %621 = vmatpush1.bf16.msra.mxu0 0
  %622 = vmatprep.subr.bf16.mxu0 0
  %623 = vmatpush1.bf16.msra.mxu0 0
  %624 = vmatprep.subr.bf16.mxu0 0
  %625 = vmatpush1.bf16.msra.mxu0 0
  %626 = vmatprep.subr.bf16.mxu0 0
  %627 = vmatpush1.bf16.msra.mxu0 0
  %628 = vmatprep.subr.bf16.mxu0 0
  %629 = vmatpush1.bf16.msra.mxu0 0
  %630 = vmatprep.subr.bf16.mxu0 0
  %631 = vmatpush1.bf16.msra.mxu0 0
  %632 = vmatprep.subr.bf16.mxu0 0
  %633 = vmatpush1.bf16.msra.mxu0 0
  %634 = vmatprep.subr.bf16.mxu0 0
  %635 = vmatpush1.bf16.msra.mxu0 0
  %636 = vmatprep.subr.bf16.mxu0 0
  %637 = vmatpush1.bf16.msra.mxu0 0
  %638 = vmatprep.subr.bf16.mxu0 0
  %639 = vmatpush1.bf16.msra.mxu0 0
  %640 = vmatprep.subr.bf16.mxu0 0
  %641 = vmatpush1.bf16.msra.mxu0 0
  %642 = vmatprep.subr.bf16.mxu0 0
  %643 = vmatpush1.bf16.msra.mxu0 0
  %644 = vmatprep.subr.bf16.mxu0 0
  %645 = vmatpush1.bf16.msra.mxu0 0
  %646 = vmatprep.mubr.bf16.mxu0 0
  %647 = vmatmul.mubr.bf16.gmra.mrb[0].mxu0 %v612
  %v648 = vpop.f32.mrb[0].mxu0
  %v649 = vadd.f32 0.0, %v648
  %v650 = vpop.f32.mrb[0].mxu0
  %v651 = vpop.f32.mrb[0].mxu0
  %v652 = vpop.f32.mrb[0].mxu0
  %653 = vdwg.mxu0
  %v654 = vadd.f32 %v141, %v649
  %v655 = vtanh.pop %v654
  %v656 = vxor.u32 %v654, 2147483648
  %v657 = vmul.f32 %v656, 1.442695
  %v658 = vpow.pop %v657
  %v659 = vadd.f32 %v658, 1.0
  %v660 = vrcp.pop %v659
  %v661 = vmul.f32 1.0, %v660
  %v662 = vsel %vm160, %v655, %v661
  %v663 = vld [vmem:[#allocation3] sm:$0xff]
  %665 = vrot.lane.b32.xlu0 %v663, 32
  %v666 = vpop.permute.xlu0 %665
  %v668 = vmul.f32 %v662, %v666
  %670 = vrot.lane.b32.xlu0 %v662, 64
  %v671 = vpop.permute.xlu0 %670
  %v673 = vmul.f32 %v662, %v671
  %675 = vrot.lane.b32.xlu0 %v673, 32
  %v676 = vpop.permute.xlu0 %675
  %v678 = vadd.f32 %v668, %v676
  %v679 = vtanh.pop %v678
  %681 = vrot.lane.b32.xlu0 %v679, 64
  %v682 = vpop.permute.xlu0 %681
  %v684 = vmul.f32 %v662, %v682
  %686 = vrot.lane.b32.xlu0 %v678, 96
  %v687 = vpop.permute.xlu0 %686
  %689 = vst.msk [vmem:[#allocation3] sm:$0xff] %vm175, %v687
  %691 = vrot.lane.b32.xlu0 %v684, 32
  %v692 = vpop.permute.xlu0 %691
  %694 = vst.msk [vmem:[#allocation2] sm:$0xff] %vm175, %v692
  %695 = vst.msk [vmem:[#allocation4 + $0x28] sm:$0xff] %vm175, %v692
  %v696 = vld [vmem:[#allocation2] sm:$0xff]
  %v697 = vpack.c.bf16 %v696, %v696
  %v699 = vsel %vm175, %v697, 0
  %701 = vmatprep.subr.bf16.mxu0 0
  %702 = vmatpush1.bf16.msra.mxu0 %v171
  %703 = vmatprep.subr.bf16.mxu0 0
  %704 = vmatpush1.bf16.msra.mxu0 %v172
  %705 = vmatprep.subr.bf16.mxu0 0
  %706 = vmatpush1.bf16.msra.mxu0 0
  %707 = vmatprep.subr.bf16.mxu0 0
  %708 = vmatpush1.bf16.msra.mxu0 0
  %709 = vmatprep.subr.bf16.mxu0 0
  %710 = vmatpush1.bf16.msra.mxu0 0
  %711 = vmatprep.subr.bf16.mxu0 0
  %712 = vmatpush1.bf16.msra.mxu0 0
  %713 = vmatprep.subr.bf16.mxu0 0
  %714 = vmatpush1.bf16.msra.mxu0 0
  %715 = vmatprep.subr.bf16.mxu0 0
  %716 = vmatpush1.bf16.msra.mxu0 0
  %717 = vmatprep.subr.bf16.mxu0 0
  %718 = vmatpush1.bf16.msra.mxu0 0
  %719 = vmatprep.subr.bf16.mxu0 0
  %720 = vmatpush1.bf16.msra.mxu0 0
  %721 = vmatprep.subr.bf16.mxu0 0
  %722 = vmatpush1.bf16.msra.mxu0 0
  %723 = vmatprep.subr.bf16.mxu0 0
  %724 = vmatpush1.bf16.msra.mxu0 0
  %725 = vmatprep.subr.bf16.mxu0 0
  %726 = vmatpush1.bf16.msra.mxu0 0
  %727 = vmatprep.subr.bf16.mxu0 0
  %728 = vmatpush1.bf16.msra.mxu0 0
  %729 = vmatprep.subr.bf16.mxu0 0
  %730 = vmatpush1.bf16.msra.mxu0 0
  %731 = vmatprep.subr.bf16.mxu0 0
  %732 = vmatpush1.bf16.msra.mxu0 0
  %733 = vmatprep.mubr.bf16.mxu0 0
  %734 = vmatmul.mubr.bf16.gmra.mrb[0].mxu0 %v699
  %v735 = vpop.f32.mrb[0].mxu0
  %v736 = vadd.f32 0.0, %v735
  %v737 = vpop.f32.mrb[0].mxu0
  %v738 = vpop.f32.mrb[0].mxu0
  %v739 = vpop.f32.mrb[0].mxu0
  %740 = vdwg.mxu0
  %v741 = vadd.f32 %v146, %v736
  %v742 = vtanh.pop %v741
  %v743 = vxor.u32 %v741, 2147483648
  %v744 = vmul.f32 %v743, 1.442695
  %v745 = vpow.pop %v744
  %v746 = vadd.f32 %v745, 1.0
  %v747 = vrcp.pop %v746
  %v748 = vmul.f32 1.0, %v747
  %v749 = vsel %vm160, %v742, %v748
  %v750 = vld [vmem:[#allocation3] sm:$0xff]
  %752 = vrot.lane.b32.xlu0 %v750, 32
  %v753 = vpop.permute.xlu0 %752
  %v755 = vmul.f32 %v749, %v753
  %757 = vrot.lane.b32.xlu0 %v749, 64
  %v758 = vpop.permute.xlu0 %757
  %v760 = vmul.f32 %v749, %v758
  %762 = vrot.lane.b32.xlu0 %v760, 32
  %v763 = vpop.permute.xlu0 %762
  %v765 = vadd.f32 %v755, %v763
  %v766 = vtanh.pop %v765
  %768 = vrot.lane.b32.xlu0 %v766, 64
  %v769 = vpop.permute.xlu0 %768
  %v771 = vmul.f32 %v749, %v769
  %773 = vrot.lane.b32.xlu0 %v765, 96
  %v774 = vpop.permute.xlu0 %773
  %776 = vst.msk [vmem:[#allocation3] sm:$0xff] %vm175, %v774
  %778 = vrot.lane.b32.xlu0 %v771, 32
  %v779 = vpop.permute.xlu0 %778
  %781 = vst.msk [vmem:[#allocation2] sm:$0xff] %vm175, %v779
  %782 = vst.msk [vmem:[#allocation4 + $0x30] sm:$0xff] %vm175, %v779
  %v783 = vld [vmem:[#allocation2] sm:$0xff]
  %v784 = vpack.c.bf16 %v783, %v783
  %v786 = vsel %vm175, %v784, 0
  %788 = vmatprep.subr.bf16.mxu0 0
  %789 = vmatpush1.bf16.msra.mxu0 %v171
  %790 = vmatprep.subr.bf16.mxu0 0
  %791 = vmatpush1.bf16.msra.mxu0 %v172
  %792 = vmatprep.subr.bf16.mxu0 0
  %793 = vmatpush1.bf16.msra.mxu0 0
  %794 = vmatprep.subr.bf16.mxu0 0
  %795 = vmatpush1.bf16.msra.mxu0 0
  %796 = vmatprep.subr.bf16.mxu0 0
  %797 = vmatpush1.bf16.msra.mxu0 0
  %798 = vmatprep.subr.bf16.mxu0 0
  %799 = vmatpush1.bf16.msra.mxu0 0
  %800 = vmatprep.subr.bf16.mxu0 0
  %801 = vmatpush1.bf16.msra.mxu0 0
  %802 = vmatprep.subr.bf16.mxu0 0
  %803 = vmatpush1.bf16.msra.mxu0 0
  %804 = vmatprep.subr.bf16.mxu0 0
  %805 = vmatpush1.bf16.msra.mxu0 0
  %806 = vmatprep.subr.bf16.mxu0 0
  %807 = vmatpush1.bf16.msra.mxu0 0
  %808 = vmatprep.subr.bf16.mxu0 0
  %809 = vmatpush1.bf16.msra.mxu0 0
  %810 = vmatprep.subr.bf16.mxu0 0
  %811 = vmatpush1.bf16.msra.mxu0 0
  %812 = vmatprep.subr.bf16.mxu0 0
  %813 = vmatpush1.bf16.msra.mxu0 0
  %814 = vmatprep.subr.bf16.mxu0 0
  %815 = vmatpush1.bf16.msra.mxu0 0
  %816 = vmatprep.subr.bf16.mxu0 0
  %817 = vmatpush1.bf16.msra.mxu0 0
  %818 = vmatprep.subr.bf16.mxu0 0
  %819 = vmatpush1.bf16.msra.mxu0 0
  %820 = vmatprep.mubr.bf16.mxu0 0
  %821 = vmatmul.mubr.bf16.gmra.mrb[0].mxu0 %v786
  %v822 = vpop.f32.mrb[0].mxu0
  %v823 = vadd.f32 0.0, %v822
  %v824 = vpop.f32.mrb[0].mxu0
  %v825 = vpop.f32.mrb[0].mxu0
  %v826 = vpop.f32.mrb[0].mxu0
  %827 = vdwg.mxu0
  %v828 = vadd.f32 %v149, %v823
  %v829 = vtanh.pop %v828
  %v830 = vxor.u32 %v828, 2147483648
  %v831 = vmul.f32 %v830, 1.442695
  %v832 = vpow.pop %v831
  %v833 = vadd.f32 %v832, 1.0
  %v834 = vrcp.pop %v833
  %v835 = vmul.f32 1.0, %v834
  %v836 = vsel %vm160, %v829, %v835
  %v837 = vld [vmem:[#allocation3] sm:$0xff]
  %839 = vrot.lane.b32.xlu0 %v837, 32
  %v840 = vpop.permute.xlu0 %839
  %v842 = vmul.f32 %v836, %v840
  %844 = vrot.lane.b32.xlu0 %v836, 64
  %v845 = vpop.permute.xlu0 %844
  %v847 = vmul.f32 %v836, %v845
  %849 = vrot.lane.b32.xlu0 %v847, 32
  %v850 = vpop.permute.xlu0 %849
  %v852 = vadd.f32 %v842, %v850
  %v853 = vtanh.pop %v852
  %855 = vrot.lane.b32.xlu0 %v853, 64
  %v856 = vpop.permute.xlu0 %855
  %v858 = vmul.f32 %v836, %v856
  %860 = vrot.lane.b32.xlu0 %v852, 96
  %v861 = vpop.permute.xlu0 %860
  %863 = vst.msk [vmem:[#allocation3] sm:$0xff] %vm175, %v861
  %865 = vrot.lane.b32.xlu0 %v858, 32
  %v866 = vpop.permute.xlu0 %865
  %868 = vst.msk [vmem:[#allocation2] sm:$0xff] %vm175, %v866
  %869 = vst.msk [vmem:[#allocation4 + $0x38] sm:$0xff] %vm175, %v866
  %v870 = vld [vmem:[#allocation4] sm:$0xff]
  %v871 = vld [vmem:[#allocation4 + $0x8] sm:$0xff]
  %v872 = vld [vmem:[#allocation4 + $0x10] sm:$0xff]
  %v873 = vld [vmem:[#allocation4 + $0x18] sm:$0xff]
  %v874 = vld [vmem:[#allocation4 + $0x20] sm:$0xff]
  %v875 = vld [vmem:[#allocation4 + $0x28] sm:$0xff]
  %v876 = vld [vmem:[#allocation4 + $0x30] sm:$0xff]
  %v877 = vld [vmem:[#allocation4 + $0x38] sm:$0xff]
  %v878 = vpack.c.bf16 %v871, %v870
  %v879 = vpack.c.bf16 %v873, %v872
  %v880 = vpack.c.bf16 %v875, %v874
  %v881 = vpack.c.bf16 %v877, %v876
  %v882 = vld [vmem:[%s4] sm:$0xf]
  %v883 = vld [vmem:[%s4 + $0x4] sm:$0xf]
  %v884 = vld [vmem:[%s4 + $0x8] sm:$0xf]
  %v885 = vld [vmem:[%s4 + $0xc] sm:$0xf]
  %v886 = vld [vmem:[%s5] sm:$0x1]
  %v888 = vlaneseq
  %v889 = vshrl.u32 %v888, 7
  %v890 = vsub.s32 0, %v889
  %v891 = vrot.slane %v886, %v890
  %v897 = vunpack.c.l.b16 %v882
  %v898 = vunpack.c.l.b16 %v883
  %v899 = vunpack.c.l.b16 %v884
  %v900 = vunpack.c.l.b16 %v885
  %v901 = vpack.c.b16 %v898, %v897
  %v902 = vpack.c.b16 %v900, %v899
  %v906 = vsel %vm175, %v878, 0
  %v909 = vsel %vm175, %v879, 0
  %v912 = vsel %vm175, %v880, 0
  %v915 = vsel %vm175, %v881, 0
  %917 = vmatprep.subr.bf16.mxu0 0
  %918 = vmatpush1.bf16.msra.mxu0 %v901
  %919 = vmatprep.subr.bf16.mxu0 0
  %920 = vmatpush1.bf16.msra.mxu0 %v902
  %921 = vmatprep.subr.bf16.mxu0 0
  %922 = vmatpush1.bf16.msra.mxu0 0
  %923 = vmatprep.subr.bf16.mxu0 0
  %924 = vmatpush1.bf16.msra.mxu0 0
  %925 = vmatprep.subr.bf16.mxu0 0
  %926 = vmatpush1.bf16.msra.mxu0 0
  %927 = vmatprep.subr.bf16.mxu0 0
  %928 = vmatpush1.bf16.msra.mxu0 0
  %929 = vmatprep.subr.bf16.mxu0 0
  %930 = vmatpush1.bf16.msra.mxu0 0
  %931 = vmatprep.subr.bf16.mxu0 0
  %932 = vmatpush1.bf16.msra.mxu0 0
  %933 = vmatprep.subr.bf16.mxu0 0
  %934 = vmatpush1.bf16.msra.mxu0 0
  %935 = vmatprep.subr.bf16.mxu0 0
  %936 = vmatpush1.bf16.msra.mxu0 0
  %937 = vmatprep.subr.bf16.mxu0 0
  %938 = vmatpush1.bf16.msra.mxu0 0
  %939 = vmatprep.subr.bf16.mxu0 0
  %940 = vmatpush1.bf16.msra.mxu0 0
  %941 = vmatprep.subr.bf16.mxu0 0
  %942 = vmatpush1.bf16.msra.mxu0 0
  %943 = vmatprep.subr.bf16.mxu0 0
  %944 = vmatpush1.bf16.msra.mxu0 0
  %945 = vmatprep.subr.bf16.mxu0 0
  %946 = vmatpush1.bf16.msra.mxu0 0
  %947 = vmatprep.subr.bf16.mxu0 0
  %948 = vmatpush1.bf16.msra.mxu0 0
  %949 = vmatprep.mubr.bf16.mxu0 0
  %950 = vmatmul.mubr.bf16.gmra.mrb[0].mxu0 %v906
  %v951 = vpop.f32.mrb[0].mxu0
  %v952 = vadd.f32 %v891, %v951
  %v953 = vpop.f32.mrb[0].mxu0
  %v954 = vpop.f32.mrb[0].mxu0
  %v955 = vadd.f32 %v891, %v954
  %v956 = vpop.f32.mrb[0].mxu0
  %957 = vmatprep.mubr.bf16.mxu0 0
  %958 = vmatmul.mubr.bf16.gmra.mrb[0].mxu0 %v909
  %v959 = vpop.f32.mrb[0].mxu0
  %v960 = vadd.f32 %v891, %v959
  %v961 = vpop.f32.mrb[0].mxu0
  %v962 = vpop.f32.mrb[0].mxu0
  %v963 = vadd.f32 %v891, %v962
  %v964 = vpop.f32.mrb[0].mxu0
  %965 = vmatprep.mubr.bf16.mxu0 0
  %966 = vmatmul.mubr.bf16.gmra.mrb[0].mxu0 %v912
  %v967 = vpop.f32.mrb[0].mxu0
  %v968 = vadd.f32 %v891, %v967
  %v969 = vpop.f32.mrb[0].mxu0
  %v970 = vpop.f32.mrb[0].mxu0
  %v971 = vadd.f32 %v891, %v970
  %v972 = vpop.f32.mrb[0].mxu0
  %973 = vmatprep.mubr.bf16.mxu0 0
  %974 = vmatmul.mubr.bf16.gmra.mrb[0].mxu0 %v915
  %v975 = vpop.f32.mrb[0].mxu0
  %v976 = vadd.f32 %v891, %v975
  %v977 = vpop.f32.mrb[0].mxu0
  %v978 = vpop.f32.mrb[0].mxu0
  %v979 = vadd.f32 %v891, %v978
  %v980 = vpop.f32.mrb[0].mxu0
  %981 = vdwg.mxu0
  %vm982 = vcmask 64512
  %v983 = vsel %vm982, %v952, -inf
  %984 = vmax.xlane.f32.xlu0 %v983
  %v985 = vpop.xlane.xlu0 %984
  %v986 = vsel %vm982, %v955, -inf
  %987 = vmax.xlane.f32.xlu0 %v986
  %v988 = vpop.xlane.xlu0 %987
  %v989 = vsel %vm982, %v960, -inf
  %990 = vmax.xlane.f32.xlu0 %v989
  %v991 = vpop.xlane.xlu0 %990
  %v992 = vsel %vm982, %v963, -inf
  %993 = vmax.xlane.f32.xlu0 %v992
  %v994 = vpop.xlane.xlu0 %993
  %v995 = vsel %vm982, %v968, -inf
  %996 = vmax.xlane.f32.xlu0 %v995
  %v997 = vpop.xlane.xlu0 %996
  %v998 = vsel %vm982, %v971, -inf
  %999 = vmax.xlane.f32.xlu0 %v998
  %v1000 = vpop.xlane.xlu0 %999
  %v1001 = vsel %vm982, %v976, -inf
  %1002 = vmax.xlane.f32.xlu0 %v1001
  %v1003 = vpop.xlane.xlu0 %1002
  %v1004 = vsel %vm982, %v979, -inf
  %1005 = vmax.xlane.f32.xlu0 %v1004
  %v1006 = vpop.xlane.xlu0 %1005
  %v1007 = vsub.f32 %v952, %v985
  %v1008 = vsub.f32 %v955, %v988
  %v1009 = vsub.f32 %v960, %v991
  %v1010 = vsub.f32 %v963, %v994
  %v1011 = vsub.f32 %v968, %v997
  %v1012 = vsub.f32 %v971, %v1000
  %v1013 = vsub.f32 %v976, %v1003
  %v1014 = vsub.f32 %v979, %v1006
  %v1015 = vmul.f32 %v1007, 1.442695
  %v1016 = vpow.pop %v1015
  %v1017 = vmul.f32 %v1008, 1.442695
  %v1018 = vpow.pop %v1017
  %v1019 = vmul.f32 %v1009, 1.442695
  %v1020 = vpow.pop %v1019
  %v1021 = vmul.f32 %v1010, 1.442695
  %v1022 = vpow.pop %v1021
  %v1023 = vmul.f32 %v1011, 1.442695
  %v1024 = vpow.pop %v1023
  %v1025 = vmul.f32 %v1012, 1.442695
  %v1026 = vpow.pop %v1025
  %v1027 = vmul.f32 %v1013, 1.442695
  %v1028 = vpow.pop %v1027
  %v1029 = vmul.f32 %v1014, 1.442695
  %v1030 = vpow.pop %v1029
  %v1031 = vsel %vm982, %v1016, 0.0
  %1032 = vadd.xlane.f32.xlu0 %v1031
  %v1033 = vpop.xlane.xlu0 %1032
  %v1034 = vsel %vm982, %v1018, 0.0
  %1035 = vadd.xlane.f32.xlu0 %v1034
  %v1036 = vpop.xlane.xlu0 %1035
  %v1037 = vsel %vm982, %v1020, 0.0
  %1038 = vadd.xlane.f32.xlu0 %v1037
  %v1039 = vpop.xlane.xlu0 %1038
  %v1040 = vsel %vm982, %v1022, 0.0
  %1041 = vadd.xlane.f32.xlu0 %v1040
  %v1042 = vpop.xlane.xlu0 %1041
  %v1043 = vsel %vm982, %v1024, 0.0
  %1044 = vadd.xlane.f32.xlu0 %v1043
  %v1045 = vpop.xlane.xlu0 %1044
  %v1046 = vsel %vm982, %v1026, 0.0
  %1047 = vadd.xlane.f32.xlu0 %v1046
  %v1048 = vpop.xlane.xlu0 %1047
  %v1049 = vsel %vm982, %v1028, 0.0
  %1050 = vadd.xlane.f32.xlu0 %v1049
  %v1051 = vpop.xlane.xlu0 %1050
  %v1052 = vsel %vm982, %v1030, 0.0
  %1053 = vadd.xlane.f32.xlu0 %v1052
  %v1054 = vpop.xlane.xlu0 %1053
  %v1055 = vlog2.pop %v1033
  %v1056 = vmul.f32 %v1055, 0.6931472
  %v1057 = vlog2.pop %v1036
  %v1058 = vmul.f32 %v1057, 0.6931472
  %v1059 = vlog2.pop %v1039
  %v1060 = vmul.f32 %v1059, 0.6931472
  %v1061 = vlog2.pop %v1042
  %v1062 = vmul.f32 %v1061, 0.6931472
  %v1063 = vlog2.pop %v1045
  %v1064 = vmul.f32 %v1063, 0.6931472
  %v1065 = vlog2.pop %v1048
  %v1066 = vmul.f32 %v1065, 0.6931472
  %v1067 = vlog2.pop %v1051
  %v1068 = vmul.f32 %v1067, 0.6931472
  %v1069 = vlog2.pop %v1054
  %v1070 = vmul.f32 %v1069, 0.6931472
  %v1071 = vsub.f32 %v1007, %v1056
  %v1072 = vsub.f32 %v1008, %v1058
  %v1073 = vsub.f32 %v1009, %v1060
  %v1074 = vsub.f32 %v1010, %v1062
  %v1075 = vsub.f32 %v1011, %v1064
  %v1076 = vsub.f32 %v1012, %v1066
  %v1077 = vsub.f32 %v1013, %v1068
  %v1078 = vsub.f32 %v1014, %v1070
  %v1087 = vrot.slane %v1072, 7
  %vm1088 = vcmask 1041409
  %v1089 = vsel %vm1088, %v1087, %v1071
  %v1090 = vrot.slane %v1073, 6
  %vm1091 = vcmask 1042434
  %v1092 = vsel %vm1091, %v1090, %v1089
  %v1093 = vrot.slane %v1074, 5
  %vm1094 = vcmask 1043459
  %v1095 = vsel %vm1094, %v1093, %v1092
  %v1096 = vrot.slane %v1075, 4
  %vm1097 = vcmask 1044484
  %v1098 = vsel %vm1097, %v1096, %v1095
  %v1099 = vrot.slane %v1076, 3
  %vm1100 = vcmask 1045509
  %v1101 = vsel %vm1100, %v1099, %v1098
  %v1102 = vrot.slane %v1077, 2
  %vm1103 = vcmask 1046534
  %v1104 = vsel %vm1103, %v1102, %v1101
  %v1105 = vrot.slane %v1078, 1
  %vm1106 = vcmask 1047559
  %v1107 = vsel %vm1106, %v1105, %v1104
  %1109 = vst.msk [vmem:[%s6] sm:$0xff] %vm982, %v1107
  %v1110 = vsel %vm1091, %v1087, %v1071
  %v1111 = vsel %vm1094, %v1090, %v1110
  %v1112 = vsel %vm1097, %v1093, %v1111
  %v1113 = vsel %vm1100, %v1096, %v1112
  %v1114 = vsel %vm1103, %v1099, %v1113
  %v1115 = vsel %vm1106, %v1102, %v1114
  %1116 = vrot.lane.b32.xlu0 %v1115, 8
  %v1117 = vpop.permute.xlu0 %1116
  %1118 = vrot.lane.b32.xlu0 %v1105, 8
  %v1119 = vpop.permute.xlu0 %1118
  %vm1122 = vcmask 130113
  %1123 = vst.msk [vmem:[%s6 - $0x1] sm:$0xfe] %vm1122, %v1117
  %vm1124 = vcmask 122944
  %1125 = vst.msk [vmem:[%s6 + $0x7] sm:$0x1] %vm1124, %v1119
  %v1126 = vsel %vm1094, %v1087, %v1071
  %v1127 = vsel %vm1097, %v1090, %v1126
  %v1128 = vsel %vm1100, %v1093, %v1127
  %v1129 = vsel %vm1103, %v1096, %v1128
  %v1130 = vsel %vm1106, %v1099, %v1129
  %v1131 = vsel %vm1088, %v1105, %v1102
  %1132 = vrot.lane.b32.xlu0 %v1130, 16
  %v1133 = vpop.permute.xlu0 %1132
  %1134 = vrot.lane.b32.xlu0 %v1131, 16
  %v1135 = vpop.permute.xlu0 %1134
  %vm1138 = vcmask 195714
  %1139 = vst.msk [vmem:[%s6 - $0x2] sm:$0xfc] %vm1138, %v1133
  %vm1140 = vcmask 189568
  %1141 = vst.msk [vmem:[%s6 + $0x6] sm:$0x3] %vm1140, %v1135
  %v1142 = vsel %vm1097, %v1087, %v1071
  %v1143 = vsel %vm1100, %v1090, %v1142
  %v1144 = vsel %vm1103, %v1093, %v1143
  %v1145 = vsel %vm1106, %v1096, %v1144
  %v1146 = vsel %vm1088, %v1102, %v1099
  %v1147 = vsel %vm1091, %v1105, %v1146
  %1148 = vrot.lane.b32.xlu0 %v1145, 24
  %v1149 = vpop.permute.xlu0 %1148
  %1150 = vrot.lane.b32.xlu0 %v1147, 24
  %v1151 = vpop.permute.xlu0 %1150
  %vm1154 = vcmask 261315
  %1155 = vst.msk [vmem:[%s6 - $0x3] sm:$0xf8] %vm1154, %v1149
  %vm1156 = vcmask 256192
  %1157 = vst.msk [vmem:[%s6 + $0x5] sm:$0x7] %vm1156, %v1151
  %v1158 = vsel %vm1100, %v1087, %v1071
  %v1159 = vsel %vm1103, %v1090, %v1158
  %v1160 = vsel %vm1106, %v1093, %v1159
  %v1161 = vsel %vm1088, %v1099, %v1096
  %v1162 = vsel %vm1091, %v1102, %v1161
  %v1163 = vsel %vm1094, %v1105, %v1162
  %1164 = vrot.lane.b32.xlu0 %v1160, 32
  %v1165 = vpop.permute.xlu0 %1164
  %1166 = vrot.lane.b32.xlu0 %v1163, 32
  %v1167 = vpop.permute.xlu0 %1166
  %vm1170 = vcmask 326916
  %1171 = vst.msk [vmem:[%s6 - $0x4] sm:$0xf0] %vm1170, %v1165
  %vm1172 = vcmask 322816
  %1173 = vst.msk [vmem:[%s6 + $0x4] sm:$0xf] %vm1172, %v1167
  %v1174 = vsel %vm1103, %v1087, %v1071
  %v1175 = vsel %vm1106, %v1090, %v1174
  %v1176 = vsel %vm1088, %v1096, %v1093
  %v1177 = vsel %vm1091, %v1099, %v1176
  %v1178 = vsel %vm1094, %v1102, %v1177
  %v1179 = vsel %vm1097, %v1105, %v1178
  %1180 = vrot.lane.b32.xlu0 %v1175, 40
  %v1181 = vpop.permute.xlu0 %1180
  %1182 = vrot.lane.b32.xlu0 %v1179, 40
  %v1183 = vpop.permute.xlu0 %1182
  %vm1186 = vcmask 392517
  %1187 = vst.msk [vmem:[%s6 - $0x5] sm:$0xe0] %vm1186, %v1181
  %vm1188 = vcmask 389440
  %1189 = vst.msk [vmem:[%s6 + $0x3] sm:$0x1f] %vm1188, %v1183
  %v1190 = vsel %vm1106, %v1087, %v1071
  %v1191 = vsel %vm1088, %v1093, %v1090
  %v1192 = vsel %vm1091, %v1096, %v1191
  %v1193 = vsel %vm1094, %v1099, %v1192
  %v1194 = vsel %vm1097, %v1102, %v1193
  %v1195 = vsel %vm1100, %v1105, %v1194
  %1196 = vrot.lane.b32.xlu0 %v1190, 48
  %v1197 = vpop.permute.xlu0 %1196
  %1198 = vrot.lane.b32.xlu0 %v1195, 48
  %v1199 = vpop.permute.xlu0 %1198
  %vm1202 = vcmask 458118
  %1203 = vst.msk [vmem:[%s6 - $0x6] sm:$0xc0] %vm1202, %v1197
  %vm1204 = vcmask 456064
  %1205 = vst.msk [vmem:[%s6 + $0x2] sm:$0x3f] %vm1204, %v1199
  %v1206 = vsel %vm1088, %v1090, %v1087
  %v1207 = vsel %vm1091, %v1093, %v1206
  %v1208 = vsel %vm1094, %v1096, %v1207
  %v1209 = vsel %vm1097, %v1099, %v1208
  %v1210 = vsel %vm1100, %v1102, %v1209
  %v1211 = vsel %vm1103, %v1105, %v1210
  %1212 = vrot.lane.b32.xlu0 %v1071, 56
  %v1213 = vpop.permute.xlu0 %1212
  %1214 = vrot.lane.b32.xlu0 %v1211, 56
  %v1215 = vpop.permute.xlu0 %1214
  %vm1218 = vcmask 523719
  %1219 = vst.msk [vmem:[%s6 - $0x7] sm:$0x80] %vm1218, %v1213
  %vm1220 = vcmask 522688
  %1221 = vst.msk [vmem:[%s6 + $0x1] sm:$0x7f] %vm1220, %v1215
  // Predicated region
  $region30: #{lstm_model_forward.1} parent=0 // pred_check
    _
  $region31: #{lstm_model_forward.1} parent=0 // pred_check_branch
    %1223 = sbr.rel (0) target = $region33
  $region32: #{lstm_model_forward.1} parent=0 // pred_region
    _
  $region33: #{lstm_model_forward.1} parent=0 // pred_fallthru
    _
  // Predicated region
  $region34: #{lstm_model_forward.1} parent=0 // pred_check
    _
  $region35: #{lstm_model_forward.1} parent=0 // pred_check_branch
    %1225 = sbr.rel (0) target = $region37
  $region36: #{lstm_model_forward.1} parent=0 // pred_region
    _
  $region37: #{lstm_model_forward.1} parent=0 // pred_fallthru
    _

</llo_original>
